<compile_context>
chip_gen: v7x
topology: tpu7x:2x2x1
jax: 0.10.0
libtpu: 0.0.40
codegen_flags: <defaults>
</compile_context>

<pallas_src>
import jax
import jax.numpy as jnp
from jax.experimental import pallas as pl
from jax.experimental.pallas import tpu as pltpu

NEG_SLOPE = 0.01                    # nn.LeakyReLU default negative_slope
_GELU_C = 0.7978845608028654        # sqrt(2/pi)


# ----------------------------------------------------------------------------
# Fused kernel on a (Cp, S_tile) channels-major tile:
#   (folded conv1+groupconv1, both halves in one MXU pass) -> GELU * Sigmoid
#   gate (tanh-only, EUP) -> +x -> conv2 -> LeakyReLU.
# ----------------------------------------------------------------------------
def _deptran_kernel(x_ref, a_ref, c_ref, w2_ref, b2_ref, o_ref):
    x = x_ref[0]                                                  # (Cp, St)
    cp = x.shape[0]

    # conv1 + groupconv1 folded: one matmul yields BOTH gating pre-activations.
    p = jnp.dot(a_ref[...], x, preferred_element_type=jnp.float32) + c_ref[...]
    p1 = p[:cp]                                                   # GELU branch
    p2 = p[cp:]                                                   # Sigmoid branch

    # GELU (tanh approx) and Sigmoid both expressed via tanh (EUP slot; no
    # VPU divide, no exp):
    #   gelu(p1)    = 0.5*p1*(1 + tanh(c*(p1 + 0.044715*p1^3)))
    #   sigmoid(p2) = 0.5*(1 + tanh(0.5*p2))
    # TODO(synk): PyTorch nn.GELU() uses the exact erf form; tanh approx
    # (max abs deviation ~3e-4) is used since erf has no guaranteed lowering.
    t1 = jnp.tanh(_GELU_C * (p1 + 0.044715 * (p1 * p1 * p1)))
    t2 = jnp.tanh(0.5 * p2)
    h = (0.25 * p1) * (1.0 + t1) * (1.0 + t2) + x                 # gate + residual

    y = jnp.dot(w2_ref[...], h, preferred_element_type=jnp.float32) + b2_ref[...]
    o_ref[0] = jnp.maximum(y, NEG_SLOPE * y).astype(o_ref.dtype)  # LeakyReLU


# ----------------------------------------------------------------------------
# Wrapper helpers
# ----------------------------------------------------------------------------
def _round_up(v, m):
    return -(-v // m) * m


def _block_diag(m, pack):
    if pack == 1:
        return m
    r, c = m.shape
    out = jnp.zeros((pack * r, pack * c), m.dtype)
    for p in range(pack):
        out = out.at[p * r:(p + 1) * r, p * c:(p + 1) * c].set(m)
    return out


def _pick_spatial_tile(S, cp, coutp, n_blocks, *, max_lanes=256 * 1024,
                       vmem_budget=32 << 20):
    """Largest lane-dense spatial tile that keeps VMEM use safe on v7x/v6e/v5e."""
    # per-lane f32 bytes: double-buffered input/output blocks...
    io_bytes = 4 * 2 * (cp + coutp)
    # ...plus worst-case live in-kernel temporaries (x, p, t1, t2, h, y).
    tmp_bytes = 4 * (cp + 2 * cp + 2 * cp + cp + coutp)
    st = vmem_budget // (io_bytes + tmp_bytes)
    st = max(512, (st // 512) * 512)
    st = min(st, max_lanes, _round_up(S, 128))
    # Keep >= 2 grid steps so both TensorCores (v7x megacore) get work.
    if n_blocks * pl.cdiv(S, st) < 2 and S > 128:
        st = _round_up(pl.cdiv(S, 2), 128)
    return st


# ----------------------------------------------------------------------------
# Wrapper: weight folding + batch packing + lane-dense (Nb, Cp, S) tiling
# ----------------------------------------------------------------------------
def deptran_forward(x, params):
    N, Cin, D, H, W = x.shape
    Cout = params["w2"].shape[0]
    S = D * H * W

    # --- fold conv1 (w1, b1) with groupconv1 (wg, bg) into one linear map.
    # groupconv1 has groups=Cin, 2 outputs per group: out[k] = wg[k]*y[k//2]+bg[k]
    w1, b1 = params["w1"], params["b1"]                  # (Cin, Cin), (Cin,)
    wg, bg = params["wg"], params["bg"]                  # (2*Cin,),   (2*Cin,)
    rows = jnp.arange(2 * Cin)
    G = jnp.zeros((2 * Cin, Cin), w1.dtype).at[rows, rows // 2].set(wg)
    A = G @ w1                                           # (2*Cin, Cin)
    c = G @ b1 + bg                                      # (2*Cin,)
    A1, A2 = A[:Cin], A[Cin:]                            # chunk(dim=channel)
    c1, c2 = c[:Cin, None], c[Cin:, None]
    w2, b2 = params["w2"], params["b2"][:, None]         # (Cout, Cin), (Cout, 1)

    # --- batch packing: fill the 8-row sublane tile when Cin < 8.
    pack = 1
    for p in (8, 4, 2):
        if N % p == 0 and p * Cin <= 8:
            pack = p
            break
    cp, coutp, n_blocks = pack * Cin, pack * Cout, N // pack

    # Block-diagonal folded weights; GELU rows first, Sigmoid rows second so
    # the kernel splits the combined pre-activation with aligned row slices.
    A_all = jnp.concatenate([_block_diag(A1, pack), _block_diag(A2, pack)], axis=0)
    c_all = jnp.concatenate([jnp.tile(c1, (pack, 1)), jnp.tile(c2, (pack, 1))],
                            axis=0)                      # (2*cp, 1)
    w2_bd = _block_diag(w2, pack)                        # (coutp, cp)
    b2_bd = jnp.tile(b2, (pack, 1))                      # (coutp, 1)

    # Channels-major, spatially flattened, batch-packed layout.
    # TODO(synk): in a real model verify this reshape (and the final one) fuse
    # into producer/consumer instead of materializing a relayout copy.
    x_ncs = x.reshape(n_blocks, cp, S)

    st = _pick_spatial_tile(S, cp, coutp, n_blocks)
    grid = (n_blocks, pl.cdiv(S, st))

    cost = pl.CostEstimate(
        flops=int(2 * (2 * Cin * Cin + Cout * Cin) * N * S),
        transcendentals=int(2 * Cin * N * S),
        bytes_accessed=int(4 * N * (Cin + Cout) * S),
    )

    out = pl.pallas_call(
        _deptran_kernel,
        out_shape=jax.ShapeDtypeStruct((n_blocks, coutp, S), jnp.float32),
        grid=grid,
        in_specs=[
            pl.BlockSpec((1, cp, st), lambda b, s: (b, 0, s)),
            pl.BlockSpec((2 * cp, cp), lambda b, s: (0, 0)),
            pl.BlockSpec((2 * cp, 1), lambda b, s: (0, 0)),
            pl.BlockSpec((coutp, cp), lambda b, s: (0, 0)),
            pl.BlockSpec((coutp, 1), lambda b, s: (0, 0)),
        ],
        out_specs=pl.BlockSpec((1, coutp, st), lambda b, s: (b, 0, s)),
        compiler_params=pltpu.CompilerParams(
            dimension_semantics=("parallel", "parallel"),
            vmem_limit_bytes=48 * 1024 * 1024),
        cost_estimate=cost,
    )(x_ncs, A_all, c_all, w2_bd, b2_bd)

    return out.reshape(N, Cout, D, H, W)


# ----------------------------------------------------------------------------
# Pure-JAX reference (unfolded, NCDHW) for correctness checking
# ----------------------------------------------------------------------------
def _gelu_tanh(v):
    return 0.5 * v * (1.0 + jnp.tanh(_GELU_C * (v + 0.044715 * v * v * v)))


def deptran_reference(x, params):
    N, Cin, D, H, W = x.shape
    w1, b1 = params["w1"], params["b1"]
    wg, bg = params["wg"], params["bg"]
    w2, b2 = params["w2"], params["b2"]

    y = jnp.einsum("oc,ncdhw->nodhw", w1, x) + b1[None, :, None, None, None]
    idx = jnp.arange(2 * Cin) // 2                       # grouped conv gather
    gout = wg[None, :, None, None, None] * y[:, idx] \
        + bg[None, :, None, None, None]
    x1, x2 = gout[:, :Cin], gout[:, Cin:]
    h = _gelu_tanh(x1) * jax.nn.sigmoid(x2) + x
    out = jnp.einsum("oc,ncdhw->nodhw", w2, h) + b2[None, :, None, None, None]
    return jnp.where(out >= 0, out, NEG_SLOPE * out)


def init_params(key, Cin, Cout):
    ks = jax.random.split(key, 6)
    return dict(
        w1=0.25 * jax.random.normal(ks[0], (Cin, Cin), jnp.float32),
        b1=0.10 * jax.random.normal(ks[1], (Cin,), jnp.float32),
        wg=0.50 * jax.random.normal(ks[2], (2 * Cin,), jnp.float32),
        bg=0.10 * jax.random.normal(ks[3], (2 * Cin,), jnp.float32),
        w2=0.25 * jax.random.normal(ks[4], (Cout, Cin), jnp.float32),
        b2=0.10 * jax.random.normal(ks[5], (Cout,), jnp.float32),
    )


if __name__ == "__main__":
    key = jax.random.PRNGKey(0)
    kx, kp = jax.random.split(key)

    N, Cin, Cout, D = 2, 4, 8, 16                        # S = 16^3 = 4096
    x = jax.random.normal(kx, (N, Cin, D, D, D), jnp.float32)
    params = init_params(kp, Cin, Cout)

    out = jax.block_until_ready(deptran_forward(x, params))
    ref = jax.block_until_ready(deptran_reference(x, params))

    assert out.shape == (N, Cout, D, D, D), out.shape
    max_err = float(jnp.max(jnp.abs(out - ref)))
    assert jnp.allclose(out, ref, rtol=1e-4, atol=1e-4), max_err
    print("KERNEL_OK")
</pallas_src>

<mosaic_0001>
module attributes {stable_mosaic.version = 11 : i64} {
  func.func @_deptran_kernel(%arg0: i32, %arg1: i32, %arg2: memref<1x8x2048xf32, #tpu.memory_space<vmem>>, %arg3: memref<16x8xf32, #tpu.memory_space<vmem>>, %arg4: memref<16x1xf32, #tpu.memory_space<vmem>>, %arg5: memref<16x8xf32, #tpu.memory_space<vmem>>, %arg6: memref<16x1xf32, #tpu.memory_space<vmem>>, %arg7: memref<1x16x2048xf32, #tpu.memory_space<vmem>>) attributes {dimension_semantics = [#tpu.dimension_semantics<parallel>, #tpu.dimension_semantics<parallel>], iteration_bounds = array<i64: 1, 2>, scalar_prefetch = 0 : i64, scratch_operands = 0 : i64, tpu.core_type = #tpu.core_type<tc>, window_params = [{transform_indices = @transform_0, window_bounds = array<i64: 1, 8, 2048>}, {pipeline_mode = #tpu.pipeline_mode<synchronous>, transform_indices = @transform_1, window_bounds = array<i64: 16, 8>}, {pipeline_mode = #tpu.pipeline_mode<synchronous>, transform_indices = @transform_2, window_bounds = array<i64: 16, 1>}, {pipeline_mode = #tpu.pipeline_mode<synchronous>, transform_indices = @transform_3, window_bounds = array<i64: 16, 8>}, {pipeline_mode = #tpu.pipeline_mode<synchronous>, transform_indices = @transform_4, window_bounds = array<i64: 16, 1>}, {transform_indices = @transform_5, window_bounds = array<i64: 1, 16, 2048>}]} {
    %c0 = arith.constant 0 : index
    %c0_0 = arith.constant 0 : index
    %c0_1 = arith.constant 0 : index
    %0 = vector.load %arg2[%c0, %c0_0, %c0_1] : memref<1x8x2048xf32, #tpu.memory_space<vmem>>, vector<1x8x2048xf32>
    %1 = vector.shape_cast %0 : vector<1x8x2048xf32> to vector<8x2048xf32>
    %c0_2 = arith.constant 0 : index
    %c0_3 = arith.constant 0 : index
    %2 = vector.load %arg3[%c0_2, %c0_3] : memref<16x8xf32, #tpu.memory_space<vmem>>, vector<16x8xf32>
    %cst = arith.constant dense<0.000000e+00> : vector<16x2048xf32>
    %3 = tpu.matmul %2, %1, %cst {dimension_numbers = #tpu.dot_dimension_numbers<[1], [0], [0], [1], [0, 0, 1, 1], [], []>} : vector<16x8xf32>, vector<8x2048xf32>, vector<16x2048xf32> -> vector<16x2048xf32>
    %c0_4 = arith.constant 0 : index
    %c0_5 = arith.constant 0 : index
    %4 = vector.load %arg4[%c0_4, %c0_5] : memref<16x1xf32, #tpu.memory_space<vmem>>, vector<16x1xf32>
    %5 = vector.broadcast %4 : vector<16x1xf32> to vector<16x2048xf32>
    %6 = arith.addf %3, %5 : vector<16x2048xf32>
    %7 = vector.extract_strided_slice %6 {offsets = [0, 0], sizes = [8, 2048], strides = [1, 1]} : vector<16x2048xf32> to vector<8x2048xf32>
    %8 = vector.extract_strided_slice %6 {offsets = [8, 0], sizes = [8, 2048], strides = [1, 1]} : vector<16x2048xf32> to vector<8x2048xf32>
    %9 = arith.mulf %7, %7 : vector<8x2048xf32>
    %10 = arith.mulf %9, %7 : vector<8x2048xf32>
    %cst_6 = arith.constant 4.471500e-02 : f32
    %11 = vector.broadcast %cst_6 : f32 to vector<8x2048xf32>
    %12 = arith.mulf %11, %10 : vector<8x2048xf32>
    %13 = arith.addf %7, %12 : vector<8x2048xf32>
    %cst_7 = arith.constant 0.797884583 : f32
    %14 = vector.broadcast %cst_7 : f32 to vector<8x2048xf32>
    %15 = arith.mulf %14, %13 : vector<8x2048xf32>
    %16 = math.tanh %15 : vector<8x2048xf32>
    %cst_8 = arith.constant 5.000000e-01 : f32
    %17 = vector.broadcast %cst_8 : f32 to vector<8x2048xf32>
    %18 = arith.mulf %17, %8 : vector<8x2048xf32>
    %19 = math.tanh %18 : vector<8x2048xf32>
    %cst_9 = arith.constant 2.500000e-01 : f32
    %20 = vector.broadcast %cst_9 : f32 to vector<8x2048xf32>
    %21 = arith.mulf %20, %7 : vector<8x2048xf32>
    %cst_10 = arith.constant 1.000000e+00 : f32
    %22 = vector.broadcast %cst_10 : f32 to vector<8x2048xf32>
    %23 = arith.addf %22, %16 : vector<8x2048xf32>
    %24 = arith.mulf %21, %23 : vector<8x2048xf32>
    %cst_11 = arith.constant 1.000000e+00 : f32
    %25 = vector.broadcast %cst_11 : f32 to vector<8x2048xf32>
    %26 = arith.addf %25, %19 : vector<8x2048xf32>
    %27 = arith.mulf %24, %26 : vector<8x2048xf32>
    %28 = arith.addf %27, %1 : vector<8x2048xf32>
    %c0_12 = arith.constant 0 : index
    %c0_13 = arith.constant 0 : index
    %29 = vector.load %arg5[%c0_12, %c0_13] : memref<16x8xf32, #tpu.memory_space<vmem>>, vector<16x8xf32>
    %cst_14 = arith.constant dense<0.000000e+00> : vector<16x2048xf32>
    %30 = tpu.matmul %29, %28, %cst_14 {dimension_numbers = #tpu.dot_dimension_numbers<[1], [0], [0], [1], [0, 0, 1, 1], [], []>} : vector<16x8xf32>, vector<8x2048xf32>, vector<16x2048xf32> -> vector<16x2048xf32>
    %c0_15 = arith.constant 0 : index
    %c0_16 = arith.constant 0 : index
    %31 = vector.load %arg6[%c0_15, %c0_16] : memref<16x1xf32, #tpu.memory_space<vmem>>, vector<16x1xf32>
    %32 = vector.broadcast %31 : vector<16x1xf32> to vector<16x2048xf32>
    %33 = arith.addf %30, %32 : vector<16x2048xf32>
    %cst_17 = arith.constant 0.00999999977 : f32
    %34 = vector.broadcast %cst_17 : f32 to vector<16x2048xf32>
    %35 = arith.mulf %34, %33 : vector<16x2048xf32>
    %36 = arith.maximumf %33, %35 : vector<16x2048xf32>
    %c0_18 = arith.constant 0 : index
    %c0_19 = arith.constant 0 : index
    %c0_20 = arith.constant 0 : index
    %37 = vector.load %arg7[%c0_18, %c0_19, %c0_20] : memref<1x16x2048xf32, #tpu.memory_space<vmem>>, vector<1x16x2048xf32>
    %38 = vector.shape_cast %37 : vector<1x16x2048xf32> to vector<16x2048xf32>
    %39 = vector.shape_cast %36 : vector<16x2048xf32> to vector<1x16x2048xf32>
    tpu.vector_store %arg7[%c0_18, %c0_19, %c0_20], %39 {strides = array<i32>} : memref<1x16x2048xf32, #tpu.memory_space<vmem>>, vector<1x16x2048xf32>,
    return
  }
  func.func @transform_0(%arg0: i32, %arg1: i32) -> (i32, i32, i32) {
    %c0_i32 = arith.constant 0 : i32
    %c0_i32_0 = arith.constant 0 : i32
    return %arg0, %c0_i32, %arg1 : i32, i32, i32
  }
  func.func @transform_1(%arg0: i32, %arg1: i32) -> (i32, i32) {
    %c0_i32 = arith.constant 0 : i32
    %c0_i32_0 = arith.constant 0 : i32
    %c0_i32_1 = arith.constant 0 : i32
    return %c0_i32, %c0_i32_0 : i32, i32
  }
  func.func @transform_2(%arg0: i32, %arg1: i32) -> (i32, i32) {
    %c0_i32 = arith.constant 0 : i32
    %c0_i32_0 = arith.constant 0 : i32
    %c0_i32_1 = arith.constant 0 : i32
    return %c0_i32, %c0_i32_0 : i32, i32
  }
  func.func @transform_3(%arg0: i32, %arg1: i32) -> (i32, i32) {
    %c0_i32 = arith.constant 0 : i32
    %c0_i32_0 = arith.constant 0 : i32
    %c0_i32_1 = arith.constant 0 : i32
    return %c0_i32, %c0_i32_0 : i32, i32
  }
  func.func @transform_4(%arg0: i32, %arg1: i32) -> (i32, i32) {
    %c0_i32 = arith.constant 0 : i32
    %c0_i32_0 = arith.constant 0 : i32
    %c0_i32_1 = arith.constant 0 : i32
    return %c0_i32, %c0_i32_0 : i32, i32
  }
  func.func @transform_5(%arg0: i32, %arg1: i32) -> (i32, i32, i32) {
    %c0_i32 = arith.constant 0 : i32
    %c0_i32_0 = arith.constant 0 : i32
    return %arg0, %c0_i32, %arg1 : i32, i32, i32
  }
}

</mosaic_0001>

<llo_original>
// kernel: tpu_custom_call.1
$region0: #{tpu_custom_call.1}
  #allocation0 [shape = 'u32[]', space=smem, size = 0x4, offset = 0x4, fixed_abs, tag = 'smem constant byte address 0x4 - core index']
  #allocation1 [shape = 'u32[144,128]{1,0:T(1,128)}', space=vmem, size = 0x12000, scoped, tag = 'internal scratch']
  %s0 = inlined_call_operand.hbm [shape: f32[1,8,4096], index: 0, kind: input, shape index: {}]
  %s1 = inlined_call_operand.vmem [shape: f32[16,8], index: 1, kind: input, shape index: {}]
  %s2 = inlined_call_operand.vmem [shape: f32[16,1], index: 2, kind: input, shape index: {}]
  %s3 = inlined_call_operand.vmem [shape: f32[16,8], index: 3, kind: input, shape index: {}]
  %s4 = inlined_call_operand.vmem [shape: f32[16,1], index: 4, kind: input, shape index: {}]
  %s5 = inlined_call_operand.hbm [shape: f32[1,16,4096], index: 5, kind: output, shape index: {}]
  %s6 = sld [smem:[#allocation0]]
  $region57: #{tpu_custom_call.1} parent=0
    _
  %s8 = ssub.s32 1, %s6
  %s9 = scalar_select 0, %s8, %s6
  $region1: #{tpu_custom_call.1} parent=0
    #allocation2 [shape = 'u8[131072]{0}', space=vmem, size = 0x20000, scoped, tag = 'input window, operand 0']
    #allocation3 [shape = 's32[2]{0}', space=sflag, size = 0x8, scoped, tag = 'scoped memory for tpu_custom_call.1']
    #allocation4 [shape = 's32[2]{0}', space=sflag, size = 0x8, scoped, tag = 'scoped memory for tpu_custom_call.1']
    #allocation5 [shape = 'u8[262144]{0}', space=vmem, size = 0x40000, scoped, tag = 'output window, operand 0']
    %10 = vsyncpa [#allocation3], 0
    %s11 = scalar_lea.sflag [#allocation3], 1
    %12 = vsyncpa %s11, 0
    %13 = vsyncpa [#allocation4], 0
    %s14 = scalar_lea.sflag [#allocation4], 1
    %15 = vsyncpa %s14, 0
    loop: start=0, step=1, limit=4
    $region2: #{tpu_custom_call.1} parent=1 // loop_pre_header
      _
    $region3: #{tpu_custom_call.1} parent=1 // loop_header
      %s17 = sphi 0, %s21
      %p18 = scmp.ge.s32.totalorder %s17, 4
      %s24 = sphi 0, %s36
      %s25 = sphi 0, %s32
      %s26 = sphi 0, %s24
      %s27 = sphi 0, %s25
      %s28 = sphi 0, %s26
      %s29 = sphi 0, %s27
      %s41 = sphi 0, %s43
      %s44 = sphi 0, %s41
      %s45 = sphi 0, %s44
      %s61 = sphi 0, %s45
      %s65 = sphi 0, %s65
      %s67 = sphi 0, %s65
      %s68 = sphi 0, %s67
      %s82 = sphi 0, %s68
      %s86 = sphi 0, %s86
      %s88 = sphi 0, %s86
      %s89 = sphi 0, %s88
      %s103 = sphi 0, %s89
      %s107 = sphi 0, %s107
      %s109 = sphi 0, %s107
      %s110 = sphi 0, %s109
      %s124 = sphi 0, %s110
      %s128 = sphi 0, %s128
      %s130 = sphi 0, %s128
      %s131 = sphi 0, %s130
      %s145 = sphi 0, %s131
      %s153 = sphi 0, %s155
      %s156 = sphi 0, %s153
      %s157 = sphi 0, %s156
      %s173 = sphi 0, %s157
    $region4: #{tpu_custom_call.1} parent=1 // loop_header_branch
      %20 = sbr.rel (%p18) target = $region8
    $region5: #{tpu_custom_call.1} parent=1 // loop_body
      %s22 = ssub.s32 %s17, 1
      %s23 = ssub.s32 %s17, 2
      %s30 = sadd.s32 1, %s25
      %p31 = scmp.ge.s32.totalorder %s30, 2
      %s32 = scalar_select %p31, 0, %s30
      %s33 = sadd.s32 1, %s24
      %s34 = scalar_select %p31, %s33, %s24
      %p35 = scmp.ge.s32.totalorder %s34, 1
      %s36 = scalar_select %p35, 0, %s34
      %s37 = ssub.s32 %s24, %s36
      %s38 = ssub.s32 %s25, %s32
      %s39 = sor.u32 %s37, %s38
      %p40 = scmp.eq.s32.totalorder %s39, 0
      %s42 = sadd.s32 %s41, 1
      %s43 = scalar_select %p40, %s41, %s42
      %p46 = pneg %p40
      %p47 = scmp.eq.s32.totalorder %s17, 1
      %p48 = por %p46, %p47
      %p49 = scmp.ne.s32.totalorder %s41, %s44
      %p50 = scmp.eq.s32.totalorder %s17, 0
      %p51 = por %p49, %p50
      %p52 = scmp.ne.s32.totalorder %s41, %s44
      %p53 = scmp.eq.s32.totalorder %s22, 1
      %p54 = por %p52, %p53
      %p55 = scmp.ne.s32.totalorder %s44, %s45
      %p56 = scmp.eq.s32.totalorder %s22, 0
      %p57 = por %p55, %p56
      %p58 = scmp.ne.s32.totalorder %s44, %s45
      %p59 = scmp.eq.s32.totalorder %s23, 1
      %p60 = por %p58, %p59
      %p62 = scmp.ne.s32.totalorder %s45, %s61
      %p63 = scmp.eq.s32.totalorder %s23, 0
      %p64 = por %p62, %p63
      %s66 = sadd.s32 %s65, 1
      %p69 = scmp.eq.s32.totalorder %s17, 1
      %p70 = scmp.ne.s32.totalorder %s65, %s67
      %p71 = scmp.eq.s32.totalorder %s17, 0
      %p72 = por %p70, %p71
      %p73 = scmp.ne.s32.totalorder %s65, %s67
      %p74 = scmp.eq.s32.totalorder %s22, 1
      %p75 = por %p73, %p74
      %p76 = scmp.ne.s32.totalorder %s67, %s68
      %p77 = scmp.eq.s32.totalorder %s22, 0
      %p78 = por %p76, %p77
      %p79 = scmp.ne.s32.totalorder %s67, %s68
      %p80 = scmp.eq.s32.totalorder %s23, 1
      %p81 = por %p79, %p80
      %p83 = scmp.ne.s32.totalorder %s68, %s82
      %p84 = scmp.eq.s32.totalorder %s23, 0
      %p85 = por %p83, %p84
      %s87 = sadd.s32 %s86, 1
      %p90 = scmp.eq.s32.totalorder %s17, 1
      %p91 = scmp.ne.s32.totalorder %s86, %s88
      %p92 = scmp.eq.s32.totalorder %s17, 0
      %p93 = por %p91, %p92
      %p94 = scmp.ne.s32.totalorder %s86, %s88
      %p95 = scmp.eq.s32.totalorder %s22, 1
      %p96 = por %p94, %p95
      %p97 = scmp.ne.s32.totalorder %s88, %s89
      %p98 = scmp.eq.s32.totalorder %s22, 0
      %p99 = por %p97, %p98
      %p100 = scmp.ne.s32.totalorder %s88, %s89
      %p101 = scmp.eq.s32.totalorder %s23, 1
      %p102 = por %p100, %p101
      %p104 = scmp.ne.s32.totalorder %s89, %s103
      %p105 = scmp.eq.s32.totalorder %s23, 0
      %p106 = por %p104, %p105
      %s108 = sadd.s32 %s107, 1
      %p111 = scmp.eq.s32.totalorder %s17, 1
      %p112 = scmp.ne.s32.totalorder %s107, %s109
      %p113 = scmp.eq.s32.totalorder %s17, 0
      %p114 = por %p112, %p113
      %p115 = scmp.ne.s32.totalorder %s107, %s109
      %p116 = scmp.eq.s32.totalorder %s22, 1
      %p117 = por %p115, %p116
      %p118 = scmp.ne.s32.totalorder %s109, %s110
      %p119 = scmp.eq.s32.totalorder %s22, 0
      %p120 = por %p118, %p119
      %p121 = scmp.ne.s32.totalorder %s109, %s110
      %p122 = scmp.eq.s32.totalorder %s23, 1
      %p123 = por %p121, %p122
      %p125 = scmp.ne.s32.totalorder %s110, %s124
      %p126 = scmp.eq.s32.totalorder %s23, 0
      %p127 = por %p125, %p126
      %s129 = sadd.s32 %s128, 1
      %p132 = scmp.eq.s32.totalorder %s17, 1
      %p133 = scmp.ne.s32.totalorder %s128, %s130
      %p134 = scmp.eq.s32.totalorder %s17, 0
      %p135 = por %p133, %p134
      %p136 = scmp.ne.s32.totalorder %s128, %s130
      %p137 = scmp.eq.s32.totalorder %s22, 1
      %p138 = por %p136, %p137
      %p139 = scmp.ne.s32.totalorder %s130, %s131
      %p140 = scmp.eq.s32.totalorder %s22, 0
      %p141 = por %p139, %p140
      %p142 = scmp.ne.s32.totalorder %s130, %s131
      %p143 = scmp.eq.s32.totalorder %s23, 1
      %p144 = por %p142, %p143
      %p146 = scmp.ne.s32.totalorder %s131, %s145
      %p147 = scmp.eq.s32.totalorder %s23, 0
      %p148 = por %p146, %p147
      %s149 = ssub.s32 %s24, %s36
      %s150 = ssub.s32 %s25, %s32
      %s151 = sor.u32 %s149, %s150
      %p152 = scmp.eq.s32.totalorder %s151, 0
      %s154 = sadd.s32 %s153, 1
      %s155 = scalar_select %p152, %s153, %s154
      %p158 = pneg %p152
      %p159 = scmp.eq.s32.totalorder %s17, 1
      %p160 = por %p158, %p159
      %p161 = scmp.ne.s32.totalorder %s153, %s156
      %p162 = scmp.eq.s32.totalorder %s17, 0
      %p163 = por %p161, %p162
      %p164 = scmp.ne.s32.totalorder %s153, %s156
      %p165 = scmp.eq.s32.totalorder %s22, 1
      %p166 = por %p164, %p165
      %p167 = scmp.ne.s32.totalorder %s156, %s157
      %p168 = scmp.eq.s32.totalorder %s22, 0
      %p169 = por %p167, %p168
      %p170 = scmp.ne.s32.totalorder %s156, %s157
      %p171 = scmp.eq.s32.totalorder %s23, 1
      %p172 = por %p170, %p171
      %p174 = scmp.ne.s32.totalorder %s157, %s173
      %p175 = scmp.eq.s32.totalorder %s23, 0
      %p176 = por %p174, %p175
      %p177 = scmp.le.s32.totalorder 1, %s17
      %p178 = scmp.lt.s32.totalorder %s17, 3
      %p179 = pnand %p177, %p178
      %p180 = pneg %p179
      // Predicated region
      $region9: #{tpu_custom_call.1} parent=5 // pred_check
        _
      $region10: #{tpu_custom_call.1} parent=5 // pred_check_branch
        %182 = sbr.rel (%p179) target = $region12
      $region11: #{tpu_custom_call.1} parent=5 // pred_region
        %s183 = ssub.s32 %s17, 1
        // Predicated region
        $region13: #{tpu_custom_call.1} parent=11 // pred_check
          %p184 = pneg %p78
        $region14: #{tpu_custom_call.1} parent=11 // pred_check_branch
          %186 = sbr.rel (%p184) target = $region16
        $region15: #{tpu_custom_call.1} parent=11 // pred_region
          _
        $region16: #{tpu_custom_call.1} parent=11 // pred_fallthru
          _
        // Predicated region
        $region17: #{tpu_custom_call.1} parent=11 // pred_check
          %p187 = pneg %p99
        $region18: #{tpu_custom_call.1} parent=11 // pred_check_branch
          %189 = sbr.rel (%p187) target = $region20
        $region19: #{tpu_custom_call.1} parent=11 // pred_region
          _
        $region20: #{tpu_custom_call.1} parent=11 // pred_fallthru
          _
        // Predicated region
        $region21: #{tpu_custom_call.1} parent=11 // pred_check
          %p190 = pneg %p120
        $region22: #{tpu_custom_call.1} parent=11 // pred_check_branch
          %192 = sbr.rel (%p190) target = $region24
        $region23: #{tpu_custom_call.1} parent=11 // pred_region
          _
        $region24: #{tpu_custom_call.1} parent=11 // pred_fallthru
          _
        // Predicated region
        $region25: #{tpu_custom_call.1} parent=11 // pred_check
          %p193 = pneg %p141
        $region26: #{tpu_custom_call.1} parent=11 // pred_check_branch
          %195 = sbr.rel (%p193) target = $region28
        $region27: #{tpu_custom_call.1} parent=11 // pred_region
          _
        $region28: #{tpu_custom_call.1} parent=11 // pred_fallthru
          _
      $region12: #{tpu_custom_call.1} parent=5 // pred_fallthru
        _
      %p196 = scmp.lt.s32.totalorder %s17, 2
      // Predicated region
      $region29: #{tpu_custom_call.1} parent=5 // pred_check
        %p197 = pneg %p196
      $region30: #{tpu_custom_call.1} parent=5 // pred_check_branch
        %199 = sbr.rel (%p197) target = $region32
      $region31: #{tpu_custom_call.1} parent=5 // pred_region
        // Predicated region
        $region33: #{tpu_custom_call.1} parent=31 // pred_check
          %p200 = pneg %p51
        $region34: #{tpu_custom_call.1} parent=31 // pred_check_branch
          %202 = sbr.rel (%p200) target = $region36
        $region35: #{tpu_custom_call.1} parent=31 // pred_region
          %s203 = sand.u32 %s41, 1
          %s204 = scalar_lea.sflag [#allocation3], %s203
          %s205 = sand.u32 %s41, 1
          %s206 = smul.addr %s205, 128
          %s207 = scalar_lea.vmem [#allocation2], %s206
          %s208 = smul.u32 16, %s25
          %s210 = ssub.s32 2048, 2048
          %211 = vsyncadd %s204, %s210
          %s212 = smul.addr %s24, 32
          %s213 = sadd.s32 %s208, %s212
          %s214 = smul.addr %s213, 128
          %s215 = scalar_lea.hbm %s0, %s214
          %s217 = sshll.u32 %s207, 4
          %s218 = int_to_ptr.vmem [resolvable:$true] %s217
          %220 = dma.hbm_to_vmem [thread:$0]  %s215, 2048, %s218, %s204
        $region36: #{tpu_custom_call.1} parent=31 // pred_fallthru
          _
      $region32: #{tpu_custom_call.1} parent=5 // pred_fallthru
        _
      %p221 = scmp.le.s32.totalorder 1, %s17
      %p222 = scmp.lt.s32.totalorder %s17, 3
      %p223 = pnand %p221, %p222
      %p224 = pneg %p223
      // Predicated region
      $region37: #{tpu_custom_call.1} parent=5 // pred_check
        _
      $region38: #{tpu_custom_call.1} parent=5 // pred_check_branch
        %226 = sbr.rel (%p223) target = $region40
      $region39: #{tpu_custom_call.1} parent=5 // pred_region
        %s227 = ssub.s32 %s17, 1
        %s228 = sand.u32 %s44, 1
        %s229 = scalar_lea.sflag [#allocation3], %s228
        %s230 = sand.u32 %s44, 1
        %s231 = smul.addr %s230, 128
        %s232 = scalar_lea.vmem [#allocation2], %s231
        // Predicated region
        $region41: #{tpu_custom_call.1} parent=39 // pred_check
          %p233 = pneg %p57
        $region42: #{tpu_custom_call.1} parent=39 // pred_check_branch
          %235 = sbr.rel (%p233) target = $region44
        $region43: #{tpu_custom_call.1} parent=39 // pred_region
          %236 = dma.done %s229, 2048
        $region44: #{tpu_custom_call.1} parent=39 // pred_fallthru
          _
        %s237 = sand.u32 %s44, 1
        %s238 = scalar_lea.sflag [#allocation3], %s237
        %s239 = sand.u32 %s44, 1
        %s240 = smul.addr %s239, 128
        %s241 = scalar_lea.vmem [#allocation2], %s240
        %p242 = pneg %p57
        %p243 = pneg %p54
        %p244 = pneg %p78
        %p245 = pneg %p75
        %p246 = pneg %p99
        %p247 = pneg %p96
        %p248 = pneg %p120
        %p249 = pneg %p117
        %p250 = pneg %p141
        %p251 = pneg %p138
        %p252 = pneg %p169
        %p253 = pneg %p166
        %s254 = sand.u32 %s156, 1
        %s255 = scalar_lea.sflag [#allocation4], %s254
        %s256 = sand.u32 %s156, 1
        %s257 = smul.addr %s256, 256
        %s258 = scalar_lea.vmem [#allocation5], %s257
        %s259 = smul.u32 16, %s27
        %s260 = smul.u32 16, %s27
        %v261 = vld [vmem:[%s232] sm:$0xff]
        %v262 = vld [vmem:[%s232 + $0x8] sm:$0xff]
        %v263 = vld [vmem:[%s232 + $0x10] sm:$0xff]
        %v264 = vld [vmem:[%s232 + $0x18] sm:$0xff]
        %v265 = vld [vmem:[%s232 + $0x20] sm:$0xff]
        %v266 = vld [vmem:[%s232 + $0x28] sm:$0xff]
        %v267 = vld [vmem:[%s232 + $0x30] sm:$0xff]
        %v268 = vld [vmem:[%s232 + $0x38] sm:$0xff]
        %v269 = vld [vmem:[%s232 + $0x40] sm:$0xff]
        %v270 = vld [vmem:[%s232 + $0x48] sm:$0xff]
        %v271 = vld [vmem:[%s232 + $0x50] sm:$0xff]
        %v272 = vld [vmem:[%s232 + $0x58] sm:$0xff]
        %v273 = vld [vmem:[%s232 + $0x60] sm:$0xff]
        %v274 = vld [vmem:[%s232 + $0x68] sm:$0xff]
        %v275 = vld [vmem:[%s232 + $0x70] sm:$0xff]
        %v276 = vld [vmem:[%s232 + $0x78] sm:$0xff]
        %v277 = vld [vmem:[%s1] sm:$0xff]
        %v278 = vld [vmem:[%s1 + $0x8] sm:$0xff]
        %v279 = vld [vmem:[%s2] sm:$0xff]
        %v280 = vld [vmem:[%s2 + $0x8] sm:$0xff]
        %282 = vset.pattern.permute.xlu0 0
        %283 = vperm.xlu0 %282, %v279
        %v284 = vpop.permute.xlu0 %283
        %287 = vset.pattern.permute.xlu0 0
        %288 = vperm.xlu0 %287, %v280
        %v289 = vpop.permute.xlu0 %288
        %vm291 = vcmask 64512
        %v293 = vsel %vm291, %v277, 0
        %v296 = vsel %vm291, %v278, 0
        %298 = vmatprep.subr.mxu0 %v262
        %299 = vmatpush1.msra.mxu0 %v261
        %300 = vmatprep.subr.mxu0 0.0
        %301 = vmatpush1.msra.mxu0 0.0
        %302 = vmatprep.subr.mxu0 0.0
        %303 = vmatpush1.msra.mxu0 0.0
        %304 = vmatprep.subr.mxu0 0.0
        %305 = vmatpush1.msra.mxu0 0.0
        %306 = vmatprep.subr.mxu0 0.0
        %307 = vmatpush1.msra.mxu0 0.0
        %308 = vmatprep.subr.mxu0 0.0
        %309 = vmatpush1.msra.mxu0 0.0
        %310 = vmatprep.subr.mxu0 0.0
        %311 = vmatpush1.msra.mxu0 0.0
        %312 = vmatprep.subr.mxu0 0.0
        %313 = vmatpush1.msra.mxu0 0.0
        %314 = vmatprep.subr.mxu0 0.0
        %315 = vmatpush1.msra.mxu0 0.0
        %316 = vmatprep.subr.mxu0 0.0
        %317 = vmatpush1.msra.mxu0 0.0
        %318 = vmatprep.subr.mxu0 0.0
        %319 = vmatpush1.msra.mxu0 0.0
        %320 = vmatprep.subr.mxu0 0.0
        %321 = vmatpush1.msra.mxu0 0.0
        %322 = vmatprep.subr.mxu0 0.0
        %323 = vmatpush1.msra.mxu0 0.0
        %324 = vmatprep.subr.mxu0 0.0
        %325 = vmatpush1.msra.mxu0 0.0
        %326 = vmatprep.subr.mxu0 0.0
        %327 = vmatpush1.msra.mxu0 0.0
        %328 = vmatprep.subr.mxu0 0.0
        %329 = vmatpush1.msra.mxu0 0.0
        %330 = vmatprep.subr.mxu0 0.0
        %331 = vmatpush1.msra.mxu0 0.0
        %332 = vmatprep.subr.mxu0 0.0
        %333 = vmatpush1.msra.mxu0 0.0
        %334 = vmatprep.subr.mxu0 0.0
        %335 = vmatpush1.msra.mxu0 0.0
        %336 = vmatprep.subr.mxu0 0.0
        %337 = vmatpush1.msra.mxu0 0.0
        %338 = vmatprep.subr.mxu0 0.0
        %339 = vmatpush1.msra.mxu0 0.0
        %340 = vmatprep.subr.mxu0 0.0
        %341 = vmatpush1.msra.mxu0 0.0
        %342 = vmatprep.subr.mxu0 0.0
        %343 = vmatpush1.msra.mxu0 0.0
        %344 = vmatprep.subr.mxu0 0.0
        %345 = vmatpush1.msra.mxu0 0.0
        %346 = vmatprep.subr.mxu0 0.0
        %347 = vmatpush1.msra.mxu0 0.0
        %348 = vmatprep.subr.mxu0 0.0
        %349 = vmatpush1.msra.mxu0 0.0
        %350 = vmatprep.subr.mxu0 0.0
        %351 = vmatpush1.msra.mxu0 0.0
        %352 = vmatprep.subr.mxu0 0.0
        %353 = vmatpush1.msra.mxu0 0.0
        %354 = vmatprep.subr.mxu0 0.0
        %355 = vmatpush1.msra.mxu0 0.0
        %356 = vmatprep.subr.mxu0 0.0
        %357 = vmatpush1.msra.mxu0 0.0
        %358 = vmatprep.subr.mxu0 0.0
        %359 = vmatpush1.msra.mxu0 0.0
        %360 = vmatprep.subr.mxu0 0.0
        %361 = vmatpush1.msra.mxu0 0.0
        %362 = vmatprep.mubr.f32.mxu0 0.0
        %363 = vmatmul.mubr.f32.gmra.mrb[0].mxu0 %v293
        %v364 = vpop.f32.mrb[0].mxu0
        %v365 = vadd.f32 %v284, %v364
        %v366 = vpop.f32.mrb[0].mxu0
        %v367 = vadd.f32 %v284, %v366
        %368 = vmatprep.mubr.f32.mxu0 0.0
        %369 = vmatmul.mubr.f32.gmra.mrb[0].mxu0 %v296
        %v370 = vpop.f32.mrb[0].mxu0
        %v371 = vadd.f32 %v289, %v370
        %v372 = vpop.f32.mrb[0].mxu0
        %v373 = vadd.f32 %v289, %v372
        %374 = vdwg.mxu0
        %375 = vmatprep.subr.mxu0 %v264
        %376 = vmatpush1.msra.mxu0 %v263
        %377 = vmatprep.subr.mxu0 0.0
        %378 = vmatpush1.msra.mxu0 0.0
        %379 = vmatprep.subr.mxu0 0.0
        %380 = vmatpush1.msra.mxu0 0.0
        %381 = vmatprep.subr.mxu0 0.0
        %382 = vmatpush1.msra.mxu0 0.0
        %383 = vmatprep.subr.mxu0 0.0
        %384 = vmatpush1.msra.mxu0 0.0
        %385 = vmatprep.subr.mxu0 0.0
        %386 = vmatpush1.msra.mxu0 0.0
        %387 = vmatprep.subr.mxu0 0.0
        %388 = vmatpush1.msra.mxu0 0.0
        %389 = vmatprep.subr.mxu0 0.0
        %390 = vmatpush1.msra.mxu0 0.0
        %391 = vmatprep.subr.mxu0 0.0
        %392 = vmatpush1.msra.mxu0 0.0
        %393 = vmatprep.subr.mxu0 0.0
        %394 = vmatpush1.msra.mxu0 0.0
        %395 = vmatprep.subr.mxu0 0.0
        %396 = vmatpush1.msra.mxu0 0.0
        %397 = vmatprep.subr.mxu0 0.0
        %398 = vmatpush1.msra.mxu0 0.0
        %399 = vmatprep.subr.mxu0 0.0
        %400 = vmatpush1.msra.mxu0 0.0
        %401 = vmatprep.subr.mxu0 0.0
        %402 = vmatpush1.msra.mxu0 0.0
        %403 = vmatprep.subr.mxu0 0.0
        %404 = vmatpush1.msra.mxu0 0.0
        %405 = vmatprep.subr.mxu0 0.0
        %406 = vmatpush1.msra.mxu0 0.0
        %407 = vmatprep.subr.mxu0 0.0
        %408 = vmatpush1.msra.mxu0 0.0
        %409 = vmatprep.subr.mxu0 0.0
        %410 = vmatpush1.msra.mxu0 0.0
        %411 = vmatprep.subr.mxu0 0.0
        %412 = vmatpush1.msra.mxu0 0.0
        %413 = vmatprep.subr.mxu0 0.0
        %414 = vmatpush1.msra.mxu0 0.0
        %415 = vmatprep.subr.mxu0 0.0
        %416 = vmatpush1.msra.mxu0 0.0
        %417 = vmatprep.subr.mxu0 0.0
        %418 = vmatpush1.msra.mxu0 0.0
        %419 = vmatprep.subr.mxu0 0.0
        %420 = vmatpush1.msra.mxu0 0.0
        %421 = vmatprep.subr.mxu0 0.0
        %422 = vmatpush1.msra.mxu0 0.0
        %423 = vmatprep.subr.mxu0 0.0
        %424 = vmatpush1.msra.mxu0 0.0
        %425 = vmatprep.subr.mxu0 0.0
        %426 = vmatpush1.msra.mxu0 0.0
        %427 = vmatprep.subr.mxu0 0.0
        %428 = vmatpush1.msra.mxu0 0.0
        %429 = vmatprep.subr.mxu0 0.0
        %430 = vmatpush1.msra.mxu0 0.0
        %431 = vmatprep.subr.mxu0 0.0
        %432 = vmatpush1.msra.mxu0 0.0
        %433 = vmatprep.subr.mxu0 0.0
        %434 = vmatpush1.msra.mxu0 0.0
        %435 = vmatprep.subr.mxu0 0.0
        %436 = vmatpush1.msra.mxu0 0.0
        %437 = vmatprep.subr.mxu0 0.0
        %438 = vmatpush1.msra.mxu0 0.0
        %439 = vmatprep.mubr.f32.mxu0 0.0
        %440 = vmatmul.mubr.f32.gmra.mrb[0].mxu0 %v293
        %v441 = vpop.f32.mrb[0].mxu0
        %v442 = vadd.f32 %v284, %v441
        %v443 = vpop.f32.mrb[0].mxu0
        %v444 = vadd.f32 %v284, %v443
        %445 = vmatprep.mubr.f32.mxu0 0.0
        %446 = vmatmul.mubr.f32.gmra.mrb[0].mxu0 %v296
        %v447 = vpop.f32.mrb[0].mxu0
        %v448 = vadd.f32 %v289, %v447
        %v449 = vpop.f32.mrb[0].mxu0
        %v450 = vadd.f32 %v289, %v449
        %451 = vdwg.mxu0
        %452 = vmatprep.subr.mxu0 %v266
        %453 = vmatpush1.msra.mxu0 %v265
        %454 = vmatprep.subr.mxu0 0.0
        %455 = vmatpush1.msra.mxu0 0.0
        %456 = vmatprep.subr.mxu0 0.0
        %457 = vmatpush1.msra.mxu0 0.0
        %458 = vmatprep.subr.mxu0 0.0
        %459 = vmatpush1.msra.mxu0 0.0
        %460 = vmatprep.subr.mxu0 0.0
        %461 = vmatpush1.msra.mxu0 0.0
        %462 = vmatprep.subr.mxu0 0.0
        %463 = vmatpush1.msra.mxu0 0.0
        %464 = vmatprep.subr.mxu0 0.0
        %465 = vmatpush1.msra.mxu0 0.0
        %466 = vmatprep.subr.mxu0 0.0
        %467 = vmatpush1.msra.mxu0 0.0
        %468 = vmatprep.subr.mxu0 0.0
        %469 = vmatpush1.msra.mxu0 0.0
        %470 = vmatprep.subr.mxu0 0.0
        %471 = vmatpush1.msra.mxu0 0.0
        %472 = vmatprep.subr.mxu0 0.0
        %473 = vmatpush1.msra.mxu0 0.0
        %474 = vmatprep.subr.mxu0 0.0
        %475 = vmatpush1.msra.mxu0 0.0
        %476 = vmatprep.subr.mxu0 0.0
        %477 = vmatpush1.msra.mxu0 0.0
        %478 = vmatprep.subr.mxu0 0.0
        %479 = vmatpush1.msra.mxu0 0.0
        %480 = vmatprep.subr.mxu0 0.0
        %481 = vmatpush1.msra.mxu0 0.0
        %482 = vmatprep.subr.mxu0 0.0
        %483 = vmatpush1.msra.mxu0 0.0
        %484 = vmatprep.subr.mxu0 0.0
        %485 = vmatpush1.msra.mxu0 0.0
        %486 = vmatprep.subr.mxu0 0.0
        %487 = vmatpush1.msra.mxu0 0.0
        %488 = vmatprep.subr.mxu0 0.0
        %489 = vmatpush1.msra.mxu0 0.0
        %490 = vmatprep.subr.mxu0 0.0
        %491 = vmatpush1.msra.mxu0 0.0
        %492 = vmatprep.subr.mxu0 0.0
        %493 = vmatpush1.msra.mxu0 0.0
        %494 = vmatprep.subr.mxu0 0.0
        %495 = vmatpush1.msra.mxu0 0.0
        %496 = vmatprep.subr.mxu0 0.0
        %497 = vmatpush1.msra.mxu0 0.0
        %498 = vmatprep.subr.mxu0 0.0
        %499 = vmatpush1.msra.mxu0 0.0
        %500 = vmatprep.subr.mxu0 0.0
        %501 = vmatpush1.msra.mxu0 0.0
        %502 = vmatprep.subr.mxu0 0.0
        %503 = vmatpush1.msra.mxu0 0.0
        %504 = vmatprep.subr.mxu0 0.0
        %505 = vmatpush1.msra.mxu0 0.0
        %506 = vmatprep.subr.mxu0 0.0
        %507 = vmatpush1.msra.mxu0 0.0
        %508 = vmatprep.subr.mxu0 0.0
        %509 = vmatpush1.msra.mxu0 0.0
        %510 = vmatprep.subr.mxu0 0.0
        %511 = vmatpush1.msra.mxu0 0.0
        %512 = vmatprep.subr.mxu0 0.0
        %513 = vmatpush1.msra.mxu0 0.0
        %514 = vmatprep.subr.mxu0 0.0
        %515 = vmatpush1.msra.mxu0 0.0
        %516 = vmatprep.mubr.f32.mxu0 0.0
        %517 = vmatmul.mubr.f32.gmra.mrb[0].mxu0 %v293
        %v518 = vpop.f32.mrb[0].mxu0
        %v519 = vadd.f32 %v284, %v518
        %v520 = vpop.f32.mrb[0].mxu0
        %v521 = vadd.f32 %v284, %v520
        %522 = vmatprep.mubr.f32.mxu0 0.0
        %523 = vmatmul.mubr.f32.gmra.mrb[0].mxu0 %v296
        %v524 = vpop.f32.mrb[0].mxu0
        %v525 = vadd.f32 %v289, %v524
        %v526 = vpop.f32.mrb[0].mxu0
        %v527 = vadd.f32 %v289, %v526
        %528 = vdwg.mxu0
        %529 = vmatprep.subr.mxu0 %v268
        %530 = vmatpush1.msra.mxu0 %v267
        %531 = vmatprep.subr.mxu0 0.0
        %532 = vmatpush1.msra.mxu0 0.0
        %533 = vmatprep.subr.mxu0 0.0
        %534 = vmatpush1.msra.mxu0 0.0
        %535 = vmatprep.subr.mxu0 0.0
        %536 = vmatpush1.msra.mxu0 0.0
        %537 = vmatprep.subr.mxu0 0.0
        %538 = vmatpush1.msra.mxu0 0.0
        %539 = vmatprep.subr.mxu0 0.0
        %540 = vmatpush1.msra.mxu0 0.0
        %541 = vmatprep.subr.mxu0 0.0
        %542 = vmatpush1.msra.mxu0 0.0
        %543 = vmatprep.subr.mxu0 0.0
        %544 = vmatpush1.msra.mxu0 0.0
        %545 = vmatprep.subr.mxu0 0.0
        %546 = vmatpush1.msra.mxu0 0.0
        %547 = vmatprep.subr.mxu0 0.0
        %548 = vmatpush1.msra.mxu0 0.0
        %549 = vmatprep.subr.mxu0 0.0
        %550 = vmatpush1.msra.mxu0 0.0
        %551 = vmatprep.subr.mxu0 0.0
        %552 = vmatpush1.msra.mxu0 0.0
        %553 = vmatprep.subr.mxu0 0.0
        %554 = vmatpush1.msra.mxu0 0.0
        %555 = vmatprep.subr.mxu0 0.0
        %556 = vmatpush1.msra.mxu0 0.0
        %557 = vmatprep.subr.mxu0 0.0
        %558 = vmatpush1.msra.mxu0 0.0
        %559 = vmatprep.subr.mxu0 0.0
        %560 = vmatpush1.msra.mxu0 0.0
        %561 = vmatprep.subr.mxu0 0.0
        %562 = vmatpush1.msra.mxu0 0.0
        %563 = vmatprep.subr.mxu0 0.0
        %564 = vmatpush1.msra.mxu0 0.0
        %565 = vmatprep.subr.mxu0 0.0
        %566 = vmatpush1.msra.mxu0 0.0
        %567 = vmatprep.subr.mxu0 0.0
        %568 = vmatpush1.msra.mxu0 0.0
        %569 = vmatprep.subr.mxu0 0.0
        %570 = vmatpush1.msra.mxu0 0.0
        %571 = vmatprep.subr.mxu0 0.0
        %572 = vmatpush1.msra.mxu0 0.0
        %573 = vmatprep.subr.mxu0 0.0
        %574 = vmatpush1.msra.mxu0 0.0
        %575 = vmatprep.subr.mxu0 0.0
        %576 = vmatpush1.msra.mxu0 0.0
        %577 = vmatprep.subr.mxu0 0.0
        %578 = vmatpush1.msra.mxu0 0.0
        %579 = vmatprep.subr.mxu0 0.0
        %580 = vmatpush1.msra.mxu0 0.0
        %581 = vmatprep.subr.mxu0 0.0
        %582 = vmatpush1.msra.mxu0 0.0
        %583 = vmatprep.subr.mxu0 0.0
        %584 = vmatpush1.msra.mxu0 0.0
        %585 = vmatprep.subr.mxu0 0.0
        %586 = vmatpush1.msra.mxu0 0.0
        %587 = vmatprep.subr.mxu0 0.0
        %588 = vmatpush1.msra.mxu0 0.0
        %589 = vmatprep.subr.mxu0 0.0
        %590 = vmatpush1.msra.mxu0 0.0
        %591 = vmatprep.subr.mxu0 0.0
        %592 = vmatpush1.msra.mxu0 0.0
        %593 = vmatprep.mubr.f32.mxu0 0.0
        %594 = vmatmul.mubr.f32.gmra.mrb[0].mxu0 %v293
        %v595 = vpop.f32.mrb[0].mxu0
        %v596 = vadd.f32 %v284, %v595
        %v597 = vpop.f32.mrb[0].mxu0
        %v598 = vadd.f32 %v284, %v597
        %599 = vmatprep.mubr.f32.mxu0 0.0
        %600 = vmatmul.mubr.f32.gmra.mrb[0].mxu0 %v296
        %v601 = vpop.f32.mrb[0].mxu0
        %v602 = vadd.f32 %v289, %v601
        %v603 = vpop.f32.mrb[0].mxu0
        %v604 = vadd.f32 %v289, %v603
        %605 = vdwg.mxu0
        %606 = vmatprep.subr.mxu0 %v270
        %607 = vmatpush1.msra.mxu0 %v269
        %608 = vmatprep.subr.mxu0 0.0
        %609 = vmatpush1.msra.mxu0 0.0
        %610 = vmatprep.subr.mxu0 0.0
        %611 = vmatpush1.msra.mxu0 0.0
        %612 = vmatprep.subr.mxu0 0.0
        %613 = vmatpush1.msra.mxu0 0.0
        %614 = vmatprep.subr.mxu0 0.0
        %615 = vmatpush1.msra.mxu0 0.0
        %616 = vmatprep.subr.mxu0 0.0
        %617 = vmatpush1.msra.mxu0 0.0
        %618 = vmatprep.subr.mxu0 0.0
        %619 = vmatpush1.msra.mxu0 0.0
        %620 = vmatprep.subr.mxu0 0.0
        %621 = vmatpush1.msra.mxu0 0.0
        %622 = vmatprep.subr.mxu0 0.0
        %623 = vmatpush1.msra.mxu0 0.0
        %624 = vmatprep.subr.mxu0 0.0
        %625 = vmatpush1.msra.mxu0 0.0
        %626 = vmatprep.subr.mxu0 0.0
        %627 = vmatpush1.msra.mxu0 0.0
        %628 = vmatprep.subr.mxu0 0.0
        %629 = vmatpush1.msra.mxu0 0.0
        %630 = vmatprep.subr.mxu0 0.0
        %631 = vmatpush1.msra.mxu0 0.0
        %632 = vmatprep.subr.mxu0 0.0
        %633 = vmatpush1.msra.mxu0 0.0
        %634 = vmatprep.subr.mxu0 0.0
        %635 = vmatpush1.msra.mxu0 0.0
        %636 = vmatprep.subr.mxu0 0.0
        %637 = vmatpush1.msra.mxu0 0.0
        %638 = vmatprep.subr.mxu0 0.0
        %639 = vmatpush1.msra.mxu0 0.0
        %640 = vmatprep.subr.mxu0 0.0
        %641 = vmatpush1.msra.mxu0 0.0
        %642 = vmatprep.subr.mxu0 0.0
        %643 = vmatpush1.msra.mxu0 0.0
        %644 = vmatprep.subr.mxu0 0.0
        %645 = vmatpush1.msra.mxu0 0.0
        %646 = vmatprep.subr.mxu0 0.0
        %647 = vmatpush1.msra.mxu0 0.0
        %648 = vmatprep.subr.mxu0 0.0
        %649 = vmatpush1.msra.mxu0 0.0
        %650 = vmatprep.subr.mxu0 0.0
        %651 = vmatpush1.msra.mxu0 0.0
        %652 = vmatprep.subr.mxu0 0.0
        %653 = vmatpush1.msra.mxu0 0.0
        %654 = vmatprep.subr.mxu0 0.0
        %655 = vmatpush1.msra.mxu0 0.0
        %656 = vmatprep.subr.mxu0 0.0
        %657 = vmatpush1.msra.mxu0 0.0
        %658 = vmatprep.subr.mxu0 0.0
        %659 = vmatpush1.msra.mxu0 0.0
        %660 = vmatprep.subr.mxu0 0.0
        %661 = vmatpush1.msra.mxu0 0.0
        %662 = vmatprep.subr.mxu0 0.0
        %663 = vmatpush1.msra.mxu0 0.0
        %664 = vmatprep.subr.mxu0 0.0
        %665 = vmatpush1.msra.mxu0 0.0
        %666 = vmatprep.subr.mxu0 0.0
        %667 = vmatpush1.msra.mxu0 0.0
        %668 = vmatprep.subr.mxu0 0.0
        %669 = vmatpush1.msra.mxu0 0.0
        %670 = vmatprep.mubr.f32.mxu0 0.0
        %671 = vmatmul.mubr.f32.gmra.mrb[0].mxu0 %v293
        %v672 = vpop.f32.mrb[0].mxu0
        %v673 = vadd.f32 %v284, %v672
        %v674 = vpop.f32.mrb[0].mxu0
        %v675 = vadd.f32 %v284, %v674
        %676 = vmatprep.mubr.f32.mxu0 0.0
        %677 = vmatmul.mubr.f32.gmra.mrb[0].mxu0 %v296
        %v678 = vpop.f32.mrb[0].mxu0
        %v679 = vadd.f32 %v289, %v678
        %v680 = vpop.f32.mrb[0].mxu0
        %v681 = vadd.f32 %v289, %v680
        %682 = vdwg.mxu0
        %683 = vmatprep.subr.mxu0 %v272
        %684 = vmatpush1.msra.mxu0 %v271
        %685 = vmatprep.subr.mxu0 0.0
        %686 = vmatpush1.msra.mxu0 0.0
        %687 = vmatprep.subr.mxu0 0.0
        %688 = vmatpush1.msra.mxu0 0.0
        %689 = vmatprep.subr.mxu0 0.0
        %690 = vmatpush1.msra.mxu0 0.0
        %691 = vmatprep.subr.mxu0 0.0
        %692 = vmatpush1.msra.mxu0 0.0
        %693 = vmatprep.subr.mxu0 0.0
        %694 = vmatpush1.msra.mxu0 0.0
        %695 = vmatprep.subr.mxu0 0.0
        %696 = vmatpush1.msra.mxu0 0.0
        %697 = vmatprep.subr.mxu0 0.0
        %698 = vmatpush1.msra.mxu0 0.0
        %699 = vmatprep.subr.mxu0 0.0
        %700 = vmatpush1.msra.mxu0 0.0
        %701 = vmatprep.subr.mxu0 0.0
        %702 = vmatpush1.msra.mxu0 0.0
        %703 = vmatprep.subr.mxu0 0.0
        %704 = vmatpush1.msra.mxu0 0.0
        %705 = vmatprep.subr.mxu0 0.0
        %706 = vmatpush1.msra.mxu0 0.0
        %707 = vmatprep.subr.mxu0 0.0
        %708 = vmatpush1.msra.mxu0 0.0
        %709 = vmatprep.subr.mxu0 0.0
        %710 = vmatpush1.msra.mxu0 0.0
        %711 = vmatprep.subr.mxu0 0.0
        %712 = vmatpush1.msra.mxu0 0.0
        %713 = vmatprep.subr.mxu0 0.0
        %714 = vmatpush1.msra.mxu0 0.0
        %715 = vmatprep.subr.mxu0 0.0
        %716 = vmatpush1.msra.mxu0 0.0
        %717 = vmatprep.subr.mxu0 0.0
        %718 = vmatpush1.msra.mxu0 0.0
        %719 = vmatprep.subr.mxu0 0.0
        %720 = vmatpush1.msra.mxu0 0.0
        %721 = vmatprep.subr.mxu0 0.0
        %722 = vmatpush1.msra.mxu0 0.0
        %723 = vmatprep.subr.mxu0 0.0
        %724 = vmatpush1.msra.mxu0 0.0
        %725 = vmatprep.subr.mxu0 0.0
        %726 = vmatpush1.msra.mxu0 0.0
        %727 = vmatprep.subr.mxu0 0.0
        %728 = vmatpush1.msra.mxu0 0.0
        %729 = vmatprep.subr.mxu0 0.0
        %730 = vmatpush1.msra.mxu0 0.0
        %731 = vmatprep.subr.mxu0 0.0
        %732 = vmatpush1.msra.mxu0 0.0
        %733 = vmatprep.subr.mxu0 0.0
        %734 = vmatpush1.msra.mxu0 0.0
        %735 = vmatprep.subr.mxu0 0.0
        %736 = vmatpush1.msra.mxu0 0.0
        %737 = vmatprep.subr.mxu0 0.0
        %738 = vmatpush1.msra.mxu0 0.0
        %739 = vmatprep.subr.mxu0 0.0
        %740 = vmatpush1.msra.mxu0 0.0
        %741 = vmatprep.subr.mxu0 0.0
        %742 = vmatpush1.msra.mxu0 0.0
        %743 = vmatprep.subr.mxu0 0.0
        %744 = vmatpush1.msra.mxu0 0.0
        %745 = vmatprep.subr.mxu0 0.0
        %746 = vmatpush1.msra.mxu0 0.0
        %747 = vmatprep.mubr.f32.mxu0 0.0
        %748 = vmatmul.mubr.f32.gmra.mrb[0].mxu0 %v293
        %v749 = vpop.f32.mrb[0].mxu0
        %v750 = vadd.f32 %v284, %v749
        %v751 = vpop.f32.mrb[0].mxu0
        %v752 = vadd.f32 %v284, %v751
        %753 = vmatprep.mubr.f32.mxu0 0.0
        %754 = vmatmul.mubr.f32.gmra.mrb[0].mxu0 %v296
        %v755 = vpop.f32.mrb[0].mxu0
        %v756 = vadd.f32 %v289, %v755
        %v757 = vpop.f32.mrb[0].mxu0
        %v758 = vadd.f32 %v289, %v757
        %759 = vdwg.mxu0
        %760 = vmatprep.subr.mxu0 %v274
        %761 = vmatpush1.msra.mxu0 %v273
        %762 = vmatprep.subr.mxu0 0.0
        %763 = vmatpush1.msra.mxu0 0.0
        %764 = vmatprep.subr.mxu0 0.0
        %765 = vmatpush1.msra.mxu0 0.0
        %766 = vmatprep.subr.mxu0 0.0
        %767 = vmatpush1.msra.mxu0 0.0
        %768 = vmatprep.subr.mxu0 0.0
        %769 = vmatpush1.msra.mxu0 0.0
        %770 = vmatprep.subr.mxu0 0.0
        %771 = vmatpush1.msra.mxu0 0.0
        %772 = vmatprep.subr.mxu0 0.0
        %773 = vmatpush1.msra.mxu0 0.0
        %774 = vmatprep.subr.mxu0 0.0
        %775 = vmatpush1.msra.mxu0 0.0
        %776 = vmatprep.subr.mxu0 0.0
        %777 = vmatpush1.msra.mxu0 0.0
        %778 = vmatprep.subr.mxu0 0.0
        %779 = vmatpush1.msra.mxu0 0.0
        %780 = vmatprep.subr.mxu0 0.0
        %781 = vmatpush1.msra.mxu0 0.0
        %782 = vmatprep.subr.mxu0 0.0
        %783 = vmatpush1.msra.mxu0 0.0
        %784 = vmatprep.subr.mxu0 0.0
        %785 = vmatpush1.msra.mxu0 0.0
        %786 = vmatprep.subr.mxu0 0.0
        %787 = vmatpush1.msra.mxu0 0.0
        %788 = vmatprep.subr.mxu0 0.0
        %789 = vmatpush1.msra.mxu0 0.0
        %790 = vmatprep.subr.mxu0 0.0
        %791 = vmatpush1.msra.mxu0 0.0
        %792 = vmatprep.subr.mxu0 0.0
        %793 = vmatpush1.msra.mxu0 0.0
        %794 = vmatprep.subr.mxu0 0.0
        %795 = vmatpush1.msra.mxu0 0.0
        %796 = vmatprep.subr.mxu0 0.0
        %797 = vmatpush1.msra.mxu0 0.0
        %798 = vmatprep.subr.mxu0 0.0
        %799 = vmatpush1.msra.mxu0 0.0
        %800 = vmatprep.subr.mxu0 0.0
        %801 = vmatpush1.msra.mxu0 0.0
        %802 = vmatprep.subr.mxu0 0.0
        %803 = vmatpush1.msra.mxu0 0.0
        %804 = vmatprep.subr.mxu0 0.0
        %805 = vmatpush1.msra.mxu0 0.0
        %806 = vmatprep.subr.mxu0 0.0
        %807 = vmatpush1.msra.mxu0 0.0
        %808 = vmatprep.subr.mxu0 0.0
        %809 = vmatpush1.msra.mxu0 0.0
        %810 = vmatprep.subr.mxu0 0.0
        %811 = vmatpush1.msra.mxu0 0.0
        %812 = vmatprep.subr.mxu0 0.0
        %813 = vmatpush1.msra.mxu0 0.0
        %814 = vmatprep.subr.mxu0 0.0
        %815 = vmatpush1.msra.mxu0 0.0
        %816 = vmatprep.subr.mxu0 0.0
        %817 = vmatpush1.msra.mxu0 0.0
        %818 = vmatprep.subr.mxu0 0.0
        %819 = vmatpush1.msra.mxu0 0.0
        %820 = vmatprep.subr.mxu0 0.0
        %821 = vmatpush1.msra.mxu0 0.0
        %822 = vmatprep.subr.mxu0 0.0
        %823 = vmatpush1.msra.mxu0 0.0
        %824 = vmatprep.mubr.f32.mxu0 0.0
        %825 = vmatmul.mubr.f32.gmra.mrb[0].mxu0 %v293
        %v826 = vpop.f32.mrb[0].mxu0
        %v827 = vadd.f32 %v284, %v826
        %v828 = vpop.f32.mrb[0].mxu0
        %v829 = vadd.f32 %v284, %v828
        %830 = vmatprep.mubr.f32.mxu0 0.0
        %831 = vmatmul.mubr.f32.gmra.mrb[0].mxu0 %v296
        %v832 = vpop.f32.mrb[0].mxu0
        %v833 = vadd.f32 %v289, %v832
        %v834 = vpop.f32.mrb[0].mxu0
        %v835 = vadd.f32 %v289, %v834
        %836 = vdwg.mxu0
        %837 = vmatprep.subr.mxu0 %v276
        %838 = vmatpush1.msra.mxu0 %v275
        %839 = vmatprep.subr.mxu0 0.0
        %840 = vmatpush1.msra.mxu0 0.0
        %841 = vmatprep.subr.mxu0 0.0
        %842 = vmatpush1.msra.mxu0 0.0
        %843 = vmatprep.subr.mxu0 0.0
        %844 = vmatpush1.msra.mxu0 0.0
        %845 = vmatprep.subr.mxu0 0.0
        %846 = vmatpush1.msra.mxu0 0.0
        %847 = vmatprep.subr.mxu0 0.0
        %848 = vmatpush1.msra.mxu0 0.0
        %849 = vmatprep.subr.mxu0 0.0
        %850 = vmatpush1.msra.mxu0 0.0
        %851 = vmatprep.subr.mxu0 0.0
        %852 = vmatpush1.msra.mxu0 0.0
        %853 = vmatprep.subr.mxu0 0.0
        %854 = vmatpush1.msra.mxu0 0.0
        %855 = vmatprep.subr.mxu0 0.0
        %856 = vmatpush1.msra.mxu0 0.0
        %857 = vmatprep.subr.mxu0 0.0
        %858 = vmatpush1.msra.mxu0 0.0
        %859 = vmatprep.subr.mxu0 0.0
        %860 = vmatpush1.msra.mxu0 0.0
        %861 = vmatprep.subr.mxu0 0.0
        %862 = vmatpush1.msra.mxu0 0.0
        %863 = vmatprep.subr.mxu0 0.0
        %864 = vmatpush1.msra.mxu0 0.0
        %865 = vmatprep.subr.mxu0 0.0
        %866 = vmatpush1.msra.mxu0 0.0
        %867 = vmatprep.subr.mxu0 0.0
        %868 = vmatpush1.msra.mxu0 0.0
        %869 = vmatprep.subr.mxu0 0.0
        %870 = vmatpush1.msra.mxu0 0.0
        %871 = vmatprep.subr.mxu0 0.0
        %872 = vmatpush1.msra.mxu0 0.0
        %873 = vmatprep.subr.mxu0 0.0
        %874 = vmatpush1.msra.mxu0 0.0
        %875 = vmatprep.subr.mxu0 0.0
        %876 = vmatpush1.msra.mxu0 0.0
        %877 = vmatprep.subr.mxu0 0.0
        %878 = vmatpush1.msra.mxu0 0.0
        %879 = vmatprep.subr.mxu0 0.0
        %880 = vmatpush1.msra.mxu0 0.0
        %881 = vmatprep.subr.mxu0 0.0
        %882 = vmatpush1.msra.mxu0 0.0
        %883 = vmatprep.subr.mxu0 0.0
        %884 = vmatpush1.msra.mxu0 0.0
        %885 = vmatprep.subr.mxu0 0.0
        %886 = vmatpush1.msra.mxu0 0.0
        %887 = vmatprep.subr.mxu0 0.0
        %888 = vmatpush1.msra.mxu0 0.0
        %889 = vmatprep.subr.mxu0 0.0
        %890 = vmatpush1.msra.mxu0 0.0
        %891 = vmatprep.subr.mxu0 0.0
        %892 = vmatpush1.msra.mxu0 0.0
        %893 = vmatprep.subr.mxu0 0.0
        %894 = vmatpush1.msra.mxu0 0.0
        %895 = vmatprep.subr.mxu0 0.0
        %896 = vmatpush1.msra.mxu0 0.0
        %897 = vmatprep.subr.mxu0 0.0
        %898 = vmatpush1.msra.mxu0 0.0
        %899 = vmatprep.subr.mxu0 0.0
        %900 = vmatpush1.msra.mxu0 0.0
        %901 = vmatprep.mubr.f32.mxu0 0.0
        %902 = vmatmul.mubr.f32.gmra.mrb[0].mxu0 %v293
        %v903 = vpop.f32.mrb[0].mxu0
        %v904 = vadd.f32 %v284, %v903
        %v905 = vpop.f32.mrb[0].mxu0
        %v906 = vadd.f32 %v284, %v905
        %907 = vmatprep.mubr.f32.mxu0 0.0
        %908 = vmatmul.mubr.f32.gmra.mrb[0].mxu0 %v296
        %v909 = vpop.f32.mrb[0].mxu0
        %v910 = vadd.f32 %v289, %v909
        %v911 = vpop.f32.mrb[0].mxu0
        %v912 = vadd.f32 %v289, %v911
        %913 = vdwg.mxu0
        %v914 = vmul.f32 %v365, %v365
        %v915 = vmul.f32 %v367, %v367
        %v916 = vmul.f32 %v442, %v442
        %v917 = vmul.f32 %v444, %v444
        %v918 = vmul.f32 %v519, %v519
        %v919 = vmul.f32 %v521, %v521
        %v920 = vmul.f32 %v596, %v596
        %v921 = vmul.f32 %v598, %v598
        %v922 = vmul.f32 %v673, %v673
        %v923 = vmul.f32 %v675, %v675
        %v924 = vmul.f32 %v750, %v750
        %v925 = vmul.f32 %v752, %v752
        %v926 = vmul.f32 %v827, %v827
        %v927 = vmul.f32 %v829, %v829
        %v928 = vmul.f32 %v904, %v904
        %v929 = vmul.f32 %v906, %v906
        %v930 = vmul.f32 %v914, %v365
        %v931 = vmul.f32 %v915, %v367
        %v932 = vmul.f32 %v916, %v442
        %v933 = vmul.f32 %v917, %v444
        %v934 = vmul.f32 %v918, %v519
        %v935 = vmul.f32 %v919, %v521
        %v936 = vmul.f32 %v920, %v596
        %v937 = vmul.f32 %v921, %v598
        %v938 = vmul.f32 %v922, %v673
        %v939 = vmul.f32 %v923, %v675
        %v940 = vmul.f32 %v924, %v750
        %v941 = vmul.f32 %v925, %v752
        %v942 = vmul.f32 %v926, %v827
        %v943 = vmul.f32 %v927, %v829
        %v944 = vmul.f32 %v928, %v904
        %v945 = vmul.f32 %v929, %v906
        %v946 = vmul.f32 %v930, 0.044715
        %v947 = vmul.f32 %v931, 0.044715
        %v948 = vmul.f32 %v932, 0.044715
        %v949 = vmul.f32 %v933, 0.044715
        %v950 = vmul.f32 %v934, 0.044715
        %v951 = vmul.f32 %v935, 0.044715
        %v952 = vmul.f32 %v936, 0.044715
        %v953 = vmul.f32 %v937, 0.044715
        %v954 = vmul.f32 %v938, 0.044715
        %v955 = vmul.f32 %v939, 0.044715
        %v956 = vmul.f32 %v940, 0.044715
        %v957 = vmul.f32 %v941, 0.044715
        %v958 = vmul.f32 %v942, 0.044715
        %v959 = vmul.f32 %v943, 0.044715
        %v960 = vmul.f32 %v944, 0.044715
        %v961 = vmul.f32 %v945, 0.044715
        %v962 = vadd.f32 %v365, %v946
        %v963 = vadd.f32 %v367, %v947
        %v964 = vadd.f32 %v442, %v948
        %v965 = vadd.f32 %v444, %v949
        %v966 = vadd.f32 %v519, %v950
        %v967 = vadd.f32 %v521, %v951
        %v968 = vadd.f32 %v596, %v952
        %v969 = vadd.f32 %v598, %v953
        %v970 = vadd.f32 %v673, %v954
        %v971 = vadd.f32 %v675, %v955
        %v972 = vadd.f32 %v750, %v956
        %v973 = vadd.f32 %v752, %v957
        %v974 = vadd.f32 %v827, %v958
        %v975 = vadd.f32 %v829, %v959
        %v976 = vadd.f32 %v904, %v960
        %v977 = vadd.f32 %v906, %v961
        %v978 = vmul.f32 %v962, 0.7978846
        %v979 = vmul.f32 %v963, 0.7978846
        %v980 = vmul.f32 %v964, 0.7978846
        %v981 = vmul.f32 %v965, 0.7978846
        %v982 = vmul.f32 %v966, 0.7978846
        %v983 = vmul.f32 %v967, 0.7978846
        %v984 = vmul.f32 %v968, 0.7978846
        %v985 = vmul.f32 %v969, 0.7978846
        %v986 = vmul.f32 %v970, 0.7978846
        %v987 = vmul.f32 %v971, 0.7978846
        %v988 = vmul.f32 %v972, 0.7978846
        %v989 = vmul.f32 %v973, 0.7978846
        %v990 = vmul.f32 %v974, 0.7978846
        %v991 = vmul.f32 %v975, 0.7978846
        %v992 = vmul.f32 %v976, 0.7978846
        %v993 = vmul.f32 %v977, 0.7978846
        %v994 = vtanh.pop %v978
        %v995 = vtanh.pop %v979
        %v996 = vtanh.pop %v980
        %v997 = vtanh.pop %v981
        %v998 = vtanh.pop %v982
        %v999 = vtanh.pop %v983
        %v1000 = vtanh.pop %v984
        %v1001 = vtanh.pop %v985
        %v1002 = vtanh.pop %v986
        %v1003 = vtanh.pop %v987
        %v1004 = vtanh.pop %v988
        %v1005 = vtanh.pop %v989
        %v1006 = vtanh.pop %v990
        %v1007 = vtanh.pop %v991
        %v1008 = vtanh.pop %v992
        %v1009 = vtanh.pop %v993
        %v1010 = vmul.f32 %v371, 0.5
        %v1011 = vmul.f32 %v373, 0.5
        %v1012 = vmul.f32 %v448, 0.5
        %v1013 = vmul.f32 %v450, 0.5
        %v1014 = vmul.f32 %v525, 0.5
        %v1015 = vmul.f32 %v527, 0.5
        %v1016 = vmul.f32 %v602, 0.5
        %v1017 = vmul.f32 %v604, 0.5
        %v1018 = vmul.f32 %v679, 0.5
        %v1019 = vmul.f32 %v681, 0.5
        %v1020 = vmul.f32 %v756, 0.5
        %v1021 = vmul.f32 %v758, 0.5
        %v1022 = vmul.f32 %v833, 0.5
        %v1023 = vmul.f32 %v835, 0.5
        %v1024 = vmul.f32 %v910, 0.5
        %v1025 = vmul.f32 %v912, 0.5
        %v1026 = vtanh.pop %v1010
        %v1027 = vtanh.pop %v1011
        %v1028 = vtanh.pop %v1012
        %v1029 = vtanh.pop %v1013
        %v1030 = vtanh.pop %v1014
        %v1031 = vtanh.pop %v1015
        %v1032 = vtanh.pop %v1016
        %v1033 = vtanh.pop %v1017
        %v1034 = vtanh.pop %v1018
        %v1035 = vtanh.pop %v1019
        %v1036 = vtanh.pop %v1020
        %v1037 = vtanh.pop %v1021
        %v1038 = vtanh.pop %v1022
        %v1039 = vtanh.pop %v1023
        %v1040 = vtanh.pop %v1024
        %v1041 = vtanh.pop %v1025
        %v1042 = vmul.f32 %v365, 0.25
        %v1043 = vmul.f32 %v367, 0.25
        %v1044 = vmul.f32 %v442, 0.25
        %v1045 = vmul.f32 %v444, 0.25
        %v1046 = vmul.f32 %v519, 0.25
        %v1047 = vmul.f32 %v521, 0.25
        %v1048 = vmul.f32 %v596, 0.25
        %v1049 = vmul.f32 %v598, 0.25
        %v1050 = vmul.f32 %v673, 0.25
        %v1051 = vmul.f32 %v675, 0.25
        %v1052 = vmul.f32 %v750, 0.25
        %v1053 = vmul.f32 %v752, 0.25
        %v1054 = vmul.f32 %v827, 0.25
        %v1055 = vmul.f32 %v829, 0.25
        %v1056 = vmul.f32 %v904, 0.25
        %v1057 = vmul.f32 %v906, 0.25
        %v1058 = vadd.f32 %v994, 1.0
        %v1059 = vadd.f32 %v995, 1.0
        %v1060 = vadd.f32 %v996, 1.0
        %v1061 = vadd.f32 %v997, 1.0
        %v1062 = vadd.f32 %v998, 1.0
        %v1063 = vadd.f32 %v999, 1.0
        %v1064 = vadd.f32 %v1000, 1.0
        %v1065 = vadd.f32 %v1001, 1.0
        %v1066 = vadd.f32 %v1002, 1.0
        %v1067 = vadd.f32 %v1003, 1.0
        %v1068 = vadd.f32 %v1004, 1.0
        %v1069 = vadd.f32 %v1005, 1.0
        %v1070 = vadd.f32 %v1006, 1.0
        %v1071 = vadd.f32 %v1007, 1.0
        %v1072 = vadd.f32 %v1008, 1.0
        %v1073 = vadd.f32 %v1009, 1.0
        %v1074 = vmul.f32 %v1042, %v1058
        %v1075 = vmul.f32 %v1043, %v1059
        %v1076 = vmul.f32 %v1044, %v1060
        %v1077 = vmul.f32 %v1045, %v1061
        %v1078 = vmul.f32 %v1046, %v1062
        %v1079 = vmul.f32 %v1047, %v1063
        %v1080 = vmul.f32 %v1048, %v1064
        %v1081 = vmul.f32 %v1049, %v1065
        %v1082 = vmul.f32 %v1050, %v1066
        %v1083 = vmul.f32 %v1051, %v1067
        %v1084 = vmul.f32 %v1052, %v1068
        %v1085 = vmul.f32 %v1053, %v1069
        %v1086 = vmul.f32 %v1054, %v1070
        %v1087 = vmul.f32 %v1055, %v1071
        %v1088 = vmul.f32 %v1056, %v1072
        %v1089 = vmul.f32 %v1057, %v1073
        %v1090 = vadd.f32 %v1026, 1.0
        %v1091 = vadd.f32 %v1027, 1.0
        %v1092 = vadd.f32 %v1028, 1.0
        %v1093 = vadd.f32 %v1029, 1.0
        %v1094 = vadd.f32 %v1030, 1.0
        %v1095 = vadd.f32 %v1031, 1.0
        %v1096 = vadd.f32 %v1032, 1.0
        %v1097 = vadd.f32 %v1033, 1.0
        %v1098 = vadd.f32 %v1034, 1.0
        %v1099 = vadd.f32 %v1035, 1.0
        %v1100 = vadd.f32 %v1036, 1.0
        %v1101 = vadd.f32 %v1037, 1.0
        %v1102 = vadd.f32 %v1038, 1.0
        %v1103 = vadd.f32 %v1039, 1.0
        %v1104 = vadd.f32 %v1040, 1.0
        %v1105 = vadd.f32 %v1041, 1.0
        %v1106 = vmul.f32 %v1074, %v1090
        %v1107 = vmul.f32 %v1075, %v1091
        %v1108 = vmul.f32 %v1076, %v1092
        %v1109 = vmul.f32 %v1077, %v1093
        %v1110 = vmul.f32 %v1078, %v1094
        %v1111 = vmul.f32 %v1079, %v1095
        %v1112 = vmul.f32 %v1080, %v1096
        %v1113 = vmul.f32 %v1081, %v1097
        %v1114 = vmul.f32 %v1082, %v1098
        %v1115 = vmul.f32 %v1083, %v1099
        %v1116 = vmul.f32 %v1084, %v1100
        %v1117 = vmul.f32 %v1085, %v1101
        %v1118 = vmul.f32 %v1086, %v1102
        %v1119 = vmul.f32 %v1087, %v1103
        %v1120 = vmul.f32 %v1088, %v1104
        %v1121 = vmul.f32 %v1089, %v1105
        %v1122 = vadd.f32 %v1106, %v261
        %v1123 = vadd.f32 %v1107, %v262
        %v1124 = vadd.f32 %v1108, %v263
        %v1125 = vadd.f32 %v1109, %v264
        %v1126 = vadd.f32 %v1110, %v265
        %v1127 = vadd.f32 %v1111, %v266
        %v1128 = vadd.f32 %v1112, %v267
        %v1129 = vadd.f32 %v1113, %v268
        %v1130 = vadd.f32 %v1114, %v269
        %v1131 = vadd.f32 %v1115, %v270
        %v1132 = vadd.f32 %v1116, %v271
        %v1133 = vadd.f32 %v1117, %v272
        %v1134 = vadd.f32 %v1118, %v273
        %v1135 = vadd.f32 %v1119, %v274
        %v1136 = vadd.f32 %v1120, %v275
        %v1137 = vadd.f32 %v1121, %v276
        %v1138 = vld [vmem:[%s3] sm:$0xff]
        %v1139 = vld [vmem:[%s3 + $0x8] sm:$0xff]
        %v1140 = vld [vmem:[%s4] sm:$0xff]
        %v1141 = vld [vmem:[%s4 + $0x8] sm:$0xff]
        %1143 = vset.pattern.permute.xlu0 0
        %1144 = vperm.xlu0 %1143, %v1140
        %v1145 = vpop.permute.xlu0 %1144
        %1148 = vset.pattern.permute.xlu0 0
        %1149 = vperm.xlu0 %1148, %v1141
        %v1150 = vpop.permute.xlu0 %1149
        %v1153 = vsel %vm291, %v1138, 0
        %v1156 = vsel %vm291, %v1139, 0
        %1158 = vmatprep.subr.mxu0 %v1123
        %1159 = vmatpush1.msra.mxu0 %v1122
        %1160 = vmatprep.subr.mxu0 0.0
        %1161 = vmatpush1.msra.mxu0 0.0
        %1162 = vmatprep.subr.mxu0 0.0
        %1163 = vmatpush1.msra.mxu0 0.0
        %1164 = vmatprep.subr.mxu0 0.0
        %1165 = vmatpush1.msra.mxu0 0.0
        %1166 = vmatprep.subr.mxu0 0.0
        %1167 = vmatpush1.msra.mxu0 0.0
        %1168 = vmatprep.subr.mxu0 0.0
        %1169 = vmatpush1.msra.mxu0 0.0
        %1170 = vmatprep.subr.mxu0 0.0
        %1171 = vmatpush1.msra.mxu0 0.0
        %1172 = vmatprep.subr.mxu0 0.0
        %1173 = vmatpush1.msra.mxu0 0.0
        %1174 = vmatprep.subr.mxu0 0.0
        %1175 = vmatpush1.msra.mxu0 0.0
        %1176 = vmatprep.subr.mxu0 0.0
        %1177 = vmatpush1.msra.mxu0 0.0
        %1178 = vmatprep.subr.mxu0 0.0
        %1179 = vmatpush1.msra.mxu0 0.0
        %1180 = vmatprep.subr.mxu0 0.0
        %1181 = vmatpush1.msra.mxu0 0.0
        %1182 = vmatprep.subr.mxu0 0.0
        %1183 = vmatpush1.msra.mxu0 0.0
        %1184 = vmatprep.subr.mxu0 0.0
        %1185 = vmatpush1.msra.mxu0 0.0
        %1186 = vmatprep.subr.mxu0 0.0
        %1187 = vmatpush1.msra.mxu0 0.0
        %1188 = vmatprep.subr.mxu0 0.0
        %1189 = vmatpush1.msra.mxu0 0.0
        %1190 = vmatprep.subr.mxu0 0.0
        %1191 = vmatpush1.msra.mxu0 0.0
        %1192 = vmatprep.subr.mxu0 0.0
        %1193 = vmatpush1.msra.mxu0 0.0
        %1194 = vmatprep.subr.mxu0 0.0
        %1195 = vmatpush1.msra.mxu0 0.0
        %1196 = vmatprep.subr.mxu0 0.0
        %1197 = vmatpush1.msra.mxu0 0.0
        %1198 = vmatprep.subr.mxu0 0.0
        %1199 = vmatpush1.msra.mxu0 0.0
        %1200 = vmatprep.subr.mxu0 0.0
        %1201 = vmatpush1.msra.mxu0 0.0
        %1202 = vmatprep.subr.mxu0 0.0
        %1203 = vmatpush1.msra.mxu0 0.0
        %1204 = vmatprep.subr.mxu0 0.0
        %1205 = vmatpush1.msra.mxu0 0.0
        %1206 = vmatprep.subr.mxu0 0.0
        %1207 = vmatpush1.msra.mxu0 0.0
        %1208 = vmatprep.subr.mxu0 0.0
        %1209 = vmatpush1.msra.mxu0 0.0
        %1210 = vmatprep.subr.mxu0 0.0
        %1211 = vmatpush1.msra.mxu0 0.0
        %1212 = vmatprep.subr.mxu0 0.0
        %1213 = vmatpush1.msra.mxu0 0.0
        %1214 = vmatprep.subr.mxu0 0.0
        %1215 = vmatpush1.msra.mxu0 0.0
        %1216 = vmatprep.subr.mxu0 0.0
        %1217 = vmatpush1.msra.mxu0 0.0
        %1218 = vmatprep.subr.mxu0 0.0
        %1219 = vmatpush1.msra.mxu0 0.0
        %1220 = vmatprep.subr.mxu0 0.0
        %1221 = vmatpush1.msra.mxu0 0.0
        %1222 = vmatprep.mubr.f32.mxu0 0.0
        %1223 = vmatmul.mubr.f32.gmra.mrb[0].mxu0 %v1153
        %v1224 = vpop.f32.mrb[0].mxu0
        %v1225 = vadd.f32 %v1145, %v1224
        %v1226 = vpop.f32.mrb[0].mxu0
        %v1227 = vadd.f32 %v1145, %v1226
        %1228 = vmatprep.mubr.f32.mxu0 0.0
        %1229 = vmatmul.mubr.f32.gmra.mrb[0].mxu0 %v1156
        %v1230 = vpop.f32.mrb[0].mxu0
        %v1231 = vadd.f32 %v1150, %v1230
        %v1232 = vpop.f32.mrb[0].mxu0
        %v1233 = vadd.f32 %v1150, %v1232
        %1234 = vdwg.mxu0
        %1235 = vmatprep.subr.mxu0 %v1125
        %1236 = vmatpush1.msra.mxu0 %v1124
        %1237 = vmatprep.subr.mxu0 0.0
        %1238 = vmatpush1.msra.mxu0 0.0
        %1239 = vmatprep.subr.mxu0 0.0
        %1240 = vmatpush1.msra.mxu0 0.0
        %1241 = vmatprep.subr.mxu0 0.0
        %1242 = vmatpush1.msra.mxu0 0.0
        %1243 = vmatprep.subr.mxu0 0.0
        %1244 = vmatpush1.msra.mxu0 0.0
        %1245 = vmatprep.subr.mxu0 0.0
        %1246 = vmatpush1.msra.mxu0 0.0
        %1247 = vmatprep.subr.mxu0 0.0
        %1248 = vmatpush1.msra.mxu0 0.0
        %1249 = vmatprep.subr.mxu0 0.0
        %1250 = vmatpush1.msra.mxu0 0.0
        %1251 = vmatprep.subr.mxu0 0.0
        %1252 = vmatpush1.msra.mxu0 0.0
        %1253 = vmatprep.subr.mxu0 0.0
        %1254 = vmatpush1.msra.mxu0 0.0
        %1255 = vmatprep.subr.mxu0 0.0
        %1256 = vmatpush1.msra.mxu0 0.0
        %1257 = vmatprep.subr.mxu0 0.0
        %1258 = vmatpush1.msra.mxu0 0.0
        %1259 = vmatprep.subr.mxu0 0.0
        %1260 = vmatpush1.msra.mxu0 0.0
        %1261 = vmatprep.subr.mxu0 0.0
        %1262 = vmatpush1.msra.mxu0 0.0
        %1263 = vmatprep.subr.mxu0 0.0
        %1264 = vmatpush1.msra.mxu0 0.0
        %1265 = vmatprep.subr.mxu0 0.0
        %1266 = vmatpush1.msra.mxu0 0.0
        %1267 = vmatprep.subr.mxu0 0.0
        %1268 = vmatpush1.msra.mxu0 0.0
        %1269 = vmatprep.subr.mxu0 0.0
        %1270 = vmatpush1.msra.mxu0 0.0
        %1271 = vmatprep.subr.mxu0 0.0
        %1272 = vmatpush1.msra.mxu0 0.0
        %1273 = vmatprep.subr.mxu0 0.0
        %1274 = vmatpush1.msra.mxu0 0.0
        %1275 = vmatprep.subr.mxu0 0.0
        %1276 = vmatpush1.msra.mxu0 0.0
        %1277 = vmatprep.subr.mxu0 0.0
        %1278 = vmatpush1.msra.mxu0 0.0
        %1279 = vmatprep.subr.mxu0 0.0
        %1280 = vmatpush1.msra.mxu0 0.0
        %1281 = vmatprep.subr.mxu0 0.0
        %1282 = vmatpush1.msra.mxu0 0.0
        %1283 = vmatprep.subr.mxu0 0.0
        %1284 = vmatpush1.msra.mxu0 0.0
        %1285 = vmatprep.subr.mxu0 0.0
        %1286 = vmatpush1.msra.mxu0 0.0
        %1287 = vmatprep.subr.mxu0 0.0
        %1288 = vmatpush1.msra.mxu0 0.0
        %1289 = vmatprep.subr.mxu0 0.0
        %1290 = vmatpush1.msra.mxu0 0.0
        %1291 = vmatprep.subr.mxu0 0.0
        %1292 = vmatpush1.msra.mxu0 0.0
        %1293 = vmatprep.subr.mxu0 0.0
        %1294 = vmatpush1.msra.mxu0 0.0
        %1295 = vmatprep.subr.mxu0 0.0
        %1296 = vmatpush1.msra.mxu0 0.0
        %1297 = vmatprep.subr.mxu0 0.0
        %1298 = vmatpush1.msra.mxu0 0.0
        %1299 = vmatprep.mubr.f32.mxu0 0.0
        %1300 = vmatmul.mubr.f32.gmra.mrb[0].mxu0 %v1153
        %v1301 = vpop.f32.mrb[0].mxu0
        %v1302 = vadd.f32 %v1145, %v1301
        %v1303 = vpop.f32.mrb[0].mxu0
        %v1304 = vadd.f32 %v1145, %v1303
        %1305 = vmatprep.mubr.f32.mxu0 0.0
        %1306 = vmatmul.mubr.f32.gmra.mrb[0].mxu0 %v1156
        %v1307 = vpop.f32.mrb[0].mxu0
        %v1308 = vadd.f32 %v1150, %v1307
        %v1309 = vpop.f32.mrb[0].mxu0
        %v1310 = vadd.f32 %v1150, %v1309
        %1311 = vdwg.mxu0
        %1312 = vmatprep.subr.mxu0 %v1127
        %1313 = vmatpush1.msra.mxu0 %v1126
        %1314 = vmatprep.subr.mxu0 0.0
        %1315 = vmatpush1.msra.mxu0 0.0
        %1316 = vmatprep.subr.mxu0 0.0
        %1317 = vmatpush1.msra.mxu0 0.0
        %1318 = vmatprep.subr.mxu0 0.0
        %1319 = vmatpush1.msra.mxu0 0.0
        %1320 = vmatprep.subr.mxu0 0.0
        %1321 = vmatpush1.msra.mxu0 0.0
        %1322 = vmatprep.subr.mxu0 0.0
        %1323 = vmatpush1.msra.mxu0 0.0
        %1324 = vmatprep.subr.mxu0 0.0
        %1325 = vmatpush1.msra.mxu0 0.0
        %1326 = vmatprep.subr.mxu0 0.0
        %1327 = vmatpush1.msra.mxu0 0.0
        %1328 = vmatprep.subr.mxu0 0.0
        %1329 = vmatpush1.msra.mxu0 0.0
        %1330 = vmatprep.subr.mxu0 0.0
        %1331 = vmatpush1.msra.mxu0 0.0
        %1332 = vmatprep.subr.mxu0 0.0
        %1333 = vmatpush1.msra.mxu0 0.0
        %1334 = vmatprep.subr.mxu0 0.0
        %1335 = vmatpush1.msra.mxu0 0.0
        %1336 = vmatprep.subr.mxu0 0.0
        %1337 = vmatpush1.msra.mxu0 0.0
        %1338 = vmatprep.subr.mxu0 0.0
        %1339 = vmatpush1.msra.mxu0 0.0
        %1340 = vmatprep.subr.mxu0 0.0
        %1341 = vmatpush1.msra.mxu0 0.0
        %1342 = vmatprep.subr.mxu0 0.0
        %1343 = vmatpush1.msra.mxu0 0.0
        %1344 = vmatprep.subr.mxu0 0.0
        %1345 = vmatpush1.msra.mxu0 0.0
        %1346 = vmatprep.subr.mxu0 0.0
        %1347 = vmatpush1.msra.mxu0 0.0
        %1348 = vmatprep.subr.mxu0 0.0
        %1349 = vmatpush1.msra.mxu0 0.0
        %1350 = vmatprep.subr.mxu0 0.0
        %1351 = vmatpush1.msra.mxu0 0.0
        %1352 = vmatprep.subr.mxu0 0.0
        %1353 = vmatpush1.msra.mxu0 0.0
        %1354 = vmatprep.subr.mxu0 0.0
        %1355 = vmatpush1.msra.mxu0 0.0
        %1356 = vmatprep.subr.mxu0 0.0
        %1357 = vmatpush1.msra.mxu0 0.0
        %1358 = vmatprep.subr.mxu0 0.0
        %1359 = vmatpush1.msra.mxu0 0.0
        %1360 = vmatprep.subr.mxu0 0.0
        %1361 = vmatpush1.msra.mxu0 0.0
        %1362 = vmatprep.subr.mxu0 0.0
        %1363 = vmatpush1.msra.mxu0 0.0
        %1364 = vmatprep.subr.mxu0 0.0
        %1365 = vmatpush1.msra.mxu0 0.0
        %1366 = vmatprep.subr.mxu0 0.0
        %1367 = vmatpush1.msra.mxu0 0.0
        %1368 = vmatprep.subr.mxu0 0.0
        %1369 = vmatpush1.msra.mxu0 0.0
        %1370 = vmatprep.subr.mxu0 0.0
        %1371 = vmatpush1.msra.mxu0 0.0
        %1372 = vmatprep.subr.mxu0 0.0
        %1373 = vmatpush1.msra.mxu0 0.0
        %1374 = vmatprep.subr.mxu0 0.0
        %1375 = vmatpush1.msra.mxu0 0.0
        %1376 = vmatprep.mubr.f32.mxu0 0.0
        %1377 = vmatmul.mubr.f32.gmra.mrb[0].mxu0 %v1153
        %v1378 = vpop.f32.mrb[0].mxu0
        %v1379 = vadd.f32 %v1145, %v1378
        %v1380 = vpop.f32.mrb[0].mxu0
        %v1381 = vadd.f32 %v1145, %v1380
        %1382 = vmatprep.mubr.f32.mxu0 0.0
        %1383 = vmatmul.mubr.f32.gmra.mrb[0].mxu0 %v1156
        %v1384 = vpop.f32.mrb[0].mxu0
        %v1385 = vadd.f32 %v1150, %v1384
        %v1386 = vpop.f32.mrb[0].mxu0
        %v1387 = vadd.f32 %v1150, %v1386
        %1388 = vdwg.mxu0
        %1389 = vmatprep.subr.mxu0 %v1129
        %1390 = vmatpush1.msra.mxu0 %v1128
        %1391 = vmatprep.subr.mxu0 0.0
        %1392 = vmatpush1.msra.mxu0 0.0
        %1393 = vmatprep.subr.mxu0 0.0
        %1394 = vmatpush1.msra.mxu0 0.0
        %1395 = vmatprep.subr.mxu0 0.0
        %1396 = vmatpush1.msra.mxu0 0.0
        %1397 = vmatprep.subr.mxu0 0.0
        %1398 = vmatpush1.msra.mxu0 0.0
        %1399 = vmatprep.subr.mxu0 0.0
        %1400 = vmatpush1.msra.mxu0 0.0
        %1401 = vmatprep.subr.mxu0 0.0
        %1402 = vmatpush1.msra.mxu0 0.0
        %1403 = vmatprep.subr.mxu0 0.0
        %1404 = vmatpush1.msra.mxu0 0.0
        %1405 = vmatprep.subr.mxu0 0.0
        %1406 = vmatpush1.msra.mxu0 0.0
        %1407 = vmatprep.subr.mxu0 0.0
        %1408 = vmatpush1.msra.mxu0 0.0
        %1409 = vmatprep.subr.mxu0 0.0
        %1410 = vmatpush1.msra.mxu0 0.0
        %1411 = vmatprep.subr.mxu0 0.0
        %1412 = vmatpush1.msra.mxu0 0.0
        %1413 = vmatprep.subr.mxu0 0.0
        %1414 = vmatpush1.msra.mxu0 0.0
        %1415 = vmatprep.subr.mxu0 0.0
        %1416 = vmatpush1.msra.mxu0 0.0
        %1417 = vmatprep.subr.mxu0 0.0
        %1418 = vmatpush1.msra.mxu0 0.0
        %1419 = vmatprep.subr.mxu0 0.0
        %1420 = vmatpush1.msra.mxu0 0.0
        %1421 = vmatprep.subr.mxu0 0.0
        %1422 = vmatpush1.msra.mxu0 0.0
        %1423 = vmatprep.subr.mxu0 0.0
        %1424 = vmatpush1.msra.mxu0 0.0
        %1425 = vmatprep.subr.mxu0 0.0
        %1426 = vmatpush1.msra.mxu0 0.0
        %1427 = vmatprep.subr.mxu0 0.0
        %1428 = vmatpush1.msra.mxu0 0.0
        %1429 = vmatprep.subr.mxu0 0.0
        %1430 = vmatpush1.msra.mxu0 0.0
        %1431 = vmatprep.subr.mxu0 0.0
        %1432 = vmatpush1.msra.mxu0 0.0
        %1433 = vmatprep.subr.mxu0 0.0
        %1434 = vmatpush1.msra.mxu0 0.0
        %1435 = vmatprep.subr.mxu0 0.0
        %1436 = vmatpush1.msra.mxu0 0.0
        %1437 = vmatprep.subr.mxu0 0.0
        %1438 = vmatpush1.msra.mxu0 0.0
        %1439 = vmatprep.subr.mxu0 0.0
        %1440 = vmatpush1.msra.mxu0 0.0
        %1441 = vmatprep.subr.mxu0 0.0
        %1442 = vmatpush1.msra.mxu0 0.0
        %1443 = vmatprep.subr.mxu0 0.0
        %1444 = vmatpush1.msra.mxu0 0.0
        %1445 = vmatprep.subr.mxu0 0.0
        %1446 = vmatpush1.msra.mxu0 0.0
        %1447 = vmatprep.subr.mxu0 0.0
        %1448 = vmatpush1.msra.mxu0 0.0
        %1449 = vmatprep.subr.mxu0 0.0
        %1450 = vmatpush1.msra.mxu0 0.0
        %1451 = vmatprep.subr.mxu0 0.0
        %1452 = vmatpush1.msra.mxu0 0.0
        %1453 = vmatprep.mubr.f32.mxu0 0.0
        %1454 = vmatmul.mubr.f32.gmra.mrb[0].mxu0 %v1153
        %v1455 = vpop.f32.mrb[0].mxu0
        %v1456 = vadd.f32 %v1145, %v1455
        %v1457 = vpop.f32.mrb[0].mxu0
        %v1458 = vadd.f32 %v1145, %v1457
        %1459 = vmatprep.mubr.f32.mxu0 0.0
        %1460 = vmatmul.mubr.f32.gmra.mrb[0].mxu0 %v1156
        %v1461 = vpop.f32.mrb[0].mxu0
        %v1462 = vadd.f32 %v1150, %v1461
        %v1463 = vpop.f32.mrb[0].mxu0
        %v1464 = vadd.f32 %v1150, %v1463
        %1465 = vdwg.mxu0
        %1466 = vmatprep.subr.mxu0 %v1131
        %1467 = vmatpush1.msra.mxu0 %v1130
        %1468 = vmatprep.subr.mxu0 0.0
        %1469 = vmatpush1.msra.mxu0 0.0
        %1470 = vmatprep.subr.mxu0 0.0
        %1471 = vmatpush1.msra.mxu0 0.0
        %1472 = vmatprep.subr.mxu0 0.0
        %1473 = vmatpush1.msra.mxu0 0.0
        %1474 = vmatprep.subr.mxu0 0.0
        %1475 = vmatpush1.msra.mxu0 0.0
        %1476 = vmatprep.subr.mxu0 0.0
        %1477 = vmatpush1.msra.mxu0 0.0
        %1478 = vmatprep.subr.mxu0 0.0
        %1479 = vmatpush1.msra.mxu0 0.0
        %1480 = vmatprep.subr.mxu0 0.0
        %1481 = vmatpush1.msra.mxu0 0.0
        %1482 = vmatprep.subr.mxu0 0.0
        %1483 = vmatpush1.msra.mxu0 0.0
        %1484 = vmatprep.subr.mxu0 0.0
        %1485 = vmatpush1.msra.mxu0 0.0
        %1486 = vmatprep.subr.mxu0 0.0
        %1487 = vmatpush1.msra.mxu0 0.0
        %1488 = vmatprep.subr.mxu0 0.0
        %1489 = vmatpush1.msra.mxu0 0.0
        %1490 = vmatprep.subr.mxu0 0.0
        %1491 = vmatpush1.msra.mxu0 0.0
        %1492 = vmatprep.subr.mxu0 0.0
        %1493 = vmatpush1.msra.mxu0 0.0
        %1494 = vmatprep.subr.mxu0 0.0
        %1495 = vmatpush1.msra.mxu0 0.0
        %1496 = vmatprep.subr.mxu0 0.0
        %1497 = vmatpush1.msra.mxu0 0.0
        %1498 = vmatprep.subr.mxu0 0.0
        %1499 = vmatpush1.msra.mxu0 0.0
        %1500 = vmatprep.subr.mxu0 0.0
        %1501 = vmatpush1.msra.mxu0 0.0
        %1502 = vmatprep.subr.mxu0 0.0
        %1503 = vmatpush1.msra.mxu0 0.0
        %1504 = vmatprep.subr.mxu0 0.0
        %1505 = vmatpush1.msra.mxu0 0.0
        %1506 = vmatprep.subr.mxu0 0.0
        %1507 = vmatpush1.msra.mxu0 0.0
        %1508 = vmatprep.subr.mxu0 0.0
        %1509 = vmatpush1.msra.mxu0 0.0
        %1510 = vmatprep.subr.mxu0 0.0
        %1511 = vmatpush1.msra.mxu0 0.0
        %1512 = vmatprep.subr.mxu0 0.0
        %1513 = vmatpush1.msra.mxu0 0.0
        %1514 = vmatprep.subr.mxu0 0.0
        %1515 = vmatpush1.msra.mxu0 0.0
        %1516 = vmatprep.subr.mxu0 0.0
        %1517 = vmatpush1.msra.mxu0 0.0
        %1518 = vmatprep.subr.mxu0 0.0
        %1519 = vmatpush1.msra.mxu0 0.0
        %1520 = vmatprep.subr.mxu0 0.0
        %1521 = vmatpush1.msra.mxu0 0.0
        %1522 = vmatprep.subr.mxu0 0.0
        %1523 = vmatpush1.msra.mxu0 0.0
        %1524 = vmatprep.subr.mxu0 0.0
        %1525 = vmatpush1.msra.mxu0 0.0
        %1526 = vmatprep.subr.mxu0 0.0
        %1527 = vmatpush1.msra.mxu0 0.0
        %1528 = vmatprep.subr.mxu0 0.0
        %1529 = vmatpush1.msra.mxu0 0.0
        %1530 = vmatprep.mubr.f32.mxu0 0.0
        %1531 = vmatmul.mubr.f32.gmra.mrb[0].mxu0 %v1153
        %v1532 = vpop.f32.mrb[0].mxu0
        %v1533 = vadd.f32 %v1145, %v1532
        %v1534 = vpop.f32.mrb[0].mxu0
        %v1535 = vadd.f32 %v1145, %v1534
        %1536 = vmatprep.mubr.f32.mxu0 0.0
        %1537 = vmatmul.mubr.f32.gmra.mrb[0].mxu0 %v1156
        %v1538 = vpop.f32.mrb[0].mxu0
        %v1539 = vadd.f32 %v1150, %v1538
        %v1540 = vpop.f32.mrb[0].mxu0
        %v1541 = vadd.f32 %v1150, %v1540
        %1542 = vdwg.mxu0
        %1543 = vmatprep.subr.mxu0 %v1133
        %1544 = vmatpush1.msra.mxu0 %v1132
        %1545 = vmatprep.subr.mxu0 0.0
        %1546 = vmatpush1.msra.mxu0 0.0
        %1547 = vmatprep.subr.mxu0 0.0
        %1548 = vmatpush1.msra.mxu0 0.0
        %1549 = vmatprep.subr.mxu0 0.0
        %1550 = vmatpush1.msra.mxu0 0.0
        %1551 = vmatprep.subr.mxu0 0.0
        %1552 = vmatpush1.msra.mxu0 0.0
        %1553 = vmatprep.subr.mxu0 0.0
        %1554 = vmatpush1.msra.mxu0 0.0
        %1555 = vmatprep.subr.mxu0 0.0
        %1556 = vmatpush1.msra.mxu0 0.0
        %1557 = vmatprep.subr.mxu0 0.0
        %1558 = vmatpush1.msra.mxu0 0.0
        %1559 = vmatprep.subr.mxu0 0.0
        %1560 = vmatpush1.msra.mxu0 0.0
        %1561 = vmatprep.subr.mxu0 0.0
        %1562 = vmatpush1.msra.mxu0 0.0
        %1563 = vmatprep.subr.mxu0 0.0
        %1564 = vmatpush1.msra.mxu0 0.0
        %1565 = vmatprep.subr.mxu0 0.0
        %1566 = vmatpush1.msra.mxu0 0.0
        %1567 = vmatprep.subr.mxu0 0.0
        %1568 = vmatpush1.msra.mxu0 0.0
        %1569 = vmatprep.subr.mxu0 0.0
        %1570 = vmatpush1.msra.mxu0 0.0
        %1571 = vmatprep.subr.mxu0 0.0
        %1572 = vmatpush1.msra.mxu0 0.0
        %1573 = vmatprep.subr.mxu0 0.0
        %1574 = vmatpush1.msra.mxu0 0.0
        %1575 = vmatprep.subr.mxu0 0.0
        %1576 = vmatpush1.msra.mxu0 0.0
        %1577 = vmatprep.subr.mxu0 0.0
        %1578 = vmatpush1.msra.mxu0 0.0
        %1579 = vmatprep.subr.mxu0 0.0
        %1580 = vmatpush1.msra.mxu0 0.0
        %1581 = vmatprep.subr.mxu0 0.0
        %1582 = vmatpush1.msra.mxu0 0.0
        %1583 = vmatprep.subr.mxu0 0.0
        %1584 = vmatpush1.msra.mxu0 0.0
        %1585 = vmatprep.subr.mxu0 0.0
        %1586 = vmatpush1.msra.mxu0 0.0
        %1587 = vmatprep.subr.mxu0 0.0
        %1588 = vmatpush1.msra.mxu0 0.0
        %1589 = vmatprep.subr.mxu0 0.0
        %1590 = vmatpush1.msra.mxu0 0.0
        %1591 = vmatprep.subr.mxu0 0.0
        %1592 = vmatpush1.msra.mxu0 0.0
        %1593 = vmatprep.subr.mxu0 0.0
        %1594 = vmatpush1.msra.mxu0 0.0
        %1595 = vmatprep.subr.mxu0 0.0
        %1596 = vmatpush1.msra.mxu0 0.0
        %1597 = vmatprep.subr.mxu0 0.0
        %1598 = vmatpush1.msra.mxu0 0.0
        %1599 = vmatprep.subr.mxu0 0.0
        %1600 = vmatpush1.msra.mxu0 0.0
        %1601 = vmatprep.subr.mxu0 0.0
        %1602 = vmatpush1.msra.mxu0 0.0
        %1603 = vmatprep.subr.mxu0 0.0
        %1604 = vmatpush1.msra.mxu0 0.0
        %1605 = vmatprep.subr.mxu0 0.0
        %1606 = vmatpush1.msra.mxu0 0.0
        %1607 = vmatprep.mubr.f32.mxu0 0.0
        %1608 = vmatmul.mubr.f32.gmra.mrb[0].mxu0 %v1153
        %v1609 = vpop.f32.mrb[0].mxu0
        %v1610 = vadd.f32 %v1145, %v1609
        %v1611 = vpop.f32.mrb[0].mxu0
        %v1612 = vadd.f32 %v1145, %v1611
        %1613 = vmatprep.mubr.f32.mxu0 0.0
        %1614 = vmatmul.mubr.f32.gmra.mrb[0].mxu0 %v1156
        %v1615 = vpop.f32.mrb[0].mxu0
        %v1616 = vadd.f32 %v1150, %v1615
        %v1617 = vpop.f32.mrb[0].mxu0
        %v1618 = vadd.f32 %v1150, %v1617
        %1619 = vdwg.mxu0
        %1620 = vmatprep.subr.mxu0 %v1135
        %1621 = vmatpush1.msra.mxu0 %v1134
        %1622 = vmatprep.subr.mxu0 0.0
        %1623 = vmatpush1.msra.mxu0 0.0
        %1624 = vmatprep.subr.mxu0 0.0
        %1625 = vmatpush1.msra.mxu0 0.0
        %1626 = vmatprep.subr.mxu0 0.0
        %1627 = vmatpush1.msra.mxu0 0.0
        %1628 = vmatprep.subr.mxu0 0.0
        %1629 = vmatpush1.msra.mxu0 0.0
        %1630 = vmatprep.subr.mxu0 0.0
        %1631 = vmatpush1.msra.mxu0 0.0
        %1632 = vmatprep.subr.mxu0 0.0
        %1633 = vmatpush1.msra.mxu0 0.0
        %1634 = vmatprep.subr.mxu0 0.0
        %1635 = vmatpush1.msra.mxu0 0.0
        %1636 = vmatprep.subr.mxu0 0.0
        %1637 = vmatpush1.msra.mxu0 0.0
        %1638 = vmatprep.subr.mxu0 0.0
        %1639 = vmatpush1.msra.mxu0 0.0
        %1640 = vmatprep.subr.mxu0 0.0
        %1641 = vmatpush1.msra.mxu0 0.0
        %1642 = vmatprep.subr.mxu0 0.0
        %1643 = vmatpush1.msra.mxu0 0.0
        %1644 = vmatprep.subr.mxu0 0.0
        %1645 = vmatpush1.msra.mxu0 0.0
        %1646 = vmatprep.subr.mxu0 0.0
        %1647 = vmatpush1.msra.mxu0 0.0
        %1648 = vmatprep.subr.mxu0 0.0
        %1649 = vmatpush1.msra.mxu0 0.0
        %1650 = vmatprep.subr.mxu0 0.0
        %1651 = vmatpush1.msra.mxu0 0.0
        %1652 = vmatprep.subr.mxu0 0.0
        %1653 = vmatpush1.msra.mxu0 0.0
        %1654 = vmatprep.subr.mxu0 0.0
        %1655 = vmatpush1.msra.mxu0 0.0
        %1656 = vmatprep.subr.mxu0 0.0
        %1657 = vmatpush1.msra.mxu0 0.0
        %1658 = vmatprep.subr.mxu0 0.0
        %1659 = vmatpush1.msra.mxu0 0.0
        %1660 = vmatprep.subr.mxu0 0.0
        %1661 = vmatpush1.msra.mxu0 0.0
        %1662 = vmatprep.subr.mxu0 0.0
        %1663 = vmatpush1.msra.mxu0 0.0
        %1664 = vmatprep.subr.mxu0 0.0
        %1665 = vmatpush1.msra.mxu0 0.0
        %1666 = vmatprep.subr.mxu0 0.0
        %1667 = vmatpush1.msra.mxu0 0.0
        %1668 = vmatprep.subr.mxu0 0.0
        %1669 = vmatpush1.msra.mxu0 0.0
        %1670 = vmatprep.subr.mxu0 0.0
        %1671 = vmatpush1.msra.mxu0 0.0
        %1672 = vmatprep.subr.mxu0 0.0
        %1673 = vmatpush1.msra.mxu0 0.0
        %1674 = vmatprep.subr.mxu0 0.0
        %1675 = vmatpush1.msra.mxu0 0.0
        %1676 = vmatprep.subr.mxu0 0.0
        %1677 = vmatpush1.msra.mxu0 0.0
        %1678 = vmatprep.subr.mxu0 0.0
        %1679 = vmatpush1.msra.mxu0 0.0
        %1680 = vmatprep.subr.mxu0 0.0
        %1681 = vmatpush1.msra.mxu0 0.0
        %1682 = vmatprep.subr.mxu0 0.0
        %1683 = vmatpush1.msra.mxu0 0.0
        %1684 = vmatprep.mubr.f32.mxu0 0.0
        %1685 = vmatmul.mubr.f32.gmra.mrb[0].mxu0 %v1153
        %v1686 = vpop.f32.mrb[0].mxu0
        %v1687 = vadd.f32 %v1145, %v1686
        %v1688 = vpop.f32.mrb[0].mxu0
        %v1689 = vadd.f32 %v1145, %v1688
        %1690 = vmatprep.mubr.f32.mxu0 0.0
        %1691 = vmatmul.mubr.f32.gmra.mrb[0].mxu0 %v1156
        %v1692 = vpop.f32.mrb[0].mxu0
        %v1693 = vadd.f32 %v1150, %v1692
        %v1694 = vpop.f32.mrb[0].mxu0
        %v1695 = vadd.f32 %v1150, %v1694
        %1696 = vdwg.mxu0
        %1697 = vmatprep.subr.mxu0 %v1137
        %1698 = vmatpush1.msra.mxu0 %v1136
        %1699 = vmatprep.subr.mxu0 0.0
        %1700 = vmatpush1.msra.mxu0 0.0
        %1701 = vmatprep.subr.mxu0 0.0
        %1702 = vmatpush1.msra.mxu0 0.0
        %1703 = vmatprep.subr.mxu0 0.0
        %1704 = vmatpush1.msra.mxu0 0.0
        %1705 = vmatprep.subr.mxu0 0.0
        %1706 = vmatpush1.msra.mxu0 0.0
        %1707 = vmatprep.subr.mxu0 0.0
        %1708 = vmatpush1.msra.mxu0 0.0
        %1709 = vmatprep.subr.mxu0 0.0
        %1710 = vmatpush1.msra.mxu0 0.0
        %1711 = vmatprep.subr.mxu0 0.0
        %1712 = vmatpush1.msra.mxu0 0.0
        %1713 = vmatprep.subr.mxu0 0.0
        %1714 = vmatpush1.msra.mxu0 0.0
        %1715 = vmatprep.subr.mxu0 0.0
        %1716 = vmatpush1.msra.mxu0 0.0
        %1717 = vmatprep.subr.mxu0 0.0
        %1718 = vmatpush1.msra.mxu0 0.0
        %1719 = vmatprep.subr.mxu0 0.0
        %1720 = vmatpush1.msra.mxu0 0.0
        %1721 = vmatprep.subr.mxu0 0.0
        %1722 = vmatpush1.msra.mxu0 0.0
        %1723 = vmatprep.subr.mxu0 0.0
        %1724 = vmatpush1.msra.mxu0 0.0
        %1725 = vmatprep.subr.mxu0 0.0
        %1726 = vmatpush1.msra.mxu0 0.0
        %1727 = vmatprep.subr.mxu0 0.0
        %1728 = vmatpush1.msra.mxu0 0.0
        %1729 = vmatprep.subr.mxu0 0.0
        %1730 = vmatpush1.msra.mxu0 0.0
        %1731 = vmatprep.subr.mxu0 0.0
        %1732 = vmatpush1.msra.mxu0 0.0
        %1733 = vmatprep.subr.mxu0 0.0
        %1734 = vmatpush1.msra.mxu0 0.0
        %1735 = vmatprep.subr.mxu0 0.0
        %1736 = vmatpush1.msra.mxu0 0.0
        %1737 = vmatprep.subr.mxu0 0.0
        %1738 = vmatpush1.msra.mxu0 0.0
        %1739 = vmatprep.subr.mxu0 0.0
        %1740 = vmatpush1.msra.mxu0 0.0
        %1741 = vmatprep.subr.mxu0 0.0
        %1742 = vmatpush1.msra.mxu0 0.0
        %1743 = vmatprep.subr.mxu0 0.0
        %1744 = vmatpush1.msra.mxu0 0.0
        %1745 = vmatprep.subr.mxu0 0.0
        %1746 = vmatpush1.msra.mxu0 0.0
        %1747 = vmatprep.subr.mxu0 0.0
        %1748 = vmatpush1.msra.mxu0 0.0
        %1749 = vmatprep.subr.mxu0 0.0
        %1750 = vmatpush1.msra.mxu0 0.0
        %1751 = vmatprep.subr.mxu0 0.0
        %1752 = vmatpush1.msra.mxu0 0.0
        %1753 = vmatprep.subr.mxu0 0.0
        %1754 = vmatpush1.msra.mxu0 0.0
        %1755 = vmatprep.subr.mxu0 0.0
        %1756 = vmatpush1.msra.mxu0 0.0
        %1757 = vmatprep.subr.mxu0 0.0
        %1758 = vmatpush1.msra.mxu0 0.0
        %1759 = vmatprep.subr.mxu0 0.0
        %1760 = vmatpush1.msra.mxu0 0.0
        %1761 = vmatprep.mubr.f32.mxu0 0.0
        %1762 = vmatmul.mubr.f32.gmra.mrb[0].mxu0 %v1153
        %v1763 = vpop.f32.mrb[0].mxu0
        %v1764 = vadd.f32 %v1145, %v1763
        %v1765 = vpop.f32.mrb[0].mxu0
        %v1766 = vadd.f32 %v1145, %v1765
        %1767 = vmatprep.mubr.f32.mxu0 0.0
        %1768 = vmatmul.mubr.f32.gmra.mrb[0].mxu0 %v1156
        %v1769 = vpop.f32.mrb[0].mxu0
        %v1770 = vadd.f32 %v1150, %v1769
        %v1771 = vpop.f32.mrb[0].mxu0
        %v1772 = vadd.f32 %v1150, %v1771
        %1773 = vdwg.mxu0
        %v1774 = vmul.f32 %v1225, 0.01
        %v1775 = vmul.f32 %v1227, 0.01
        %v1776 = vmul.f32 %v1302, 0.01
        %v1777 = vmul.f32 %v1304, 0.01
        %v1778 = vmul.f32 %v1379, 0.01
        %v1779 = vmul.f32 %v1381, 0.01
        %v1780 = vmul.f32 %v1456, 0.01
        %v1781 = vmul.f32 %v1458, 0.01
        %v1782 = vmul.f32 %v1533, 0.01
        %v1783 = vmul.f32 %v1535, 0.01
        %v1784 = vmul.f32 %v1610, 0.01
        %v1785 = vmul.f32 %v1612, 0.01
        %v1786 = vmul.f32 %v1687, 0.01
        %v1787 = vmul.f32 %v1689, 0.01
        %v1788 = vmul.f32 %v1764, 0.01
        %v1789 = vmul.f32 %v1766, 0.01
        %v1790 = vmul.f32 %v1231, 0.01
        %v1791 = vmul.f32 %v1233, 0.01
        %v1792 = vmul.f32 %v1308, 0.01
        %v1793 = vmul.f32 %v1310, 0.01
        %v1794 = vmul.f32 %v1385, 0.01
        %v1795 = vmul.f32 %v1387, 0.01
        %v1796 = vmul.f32 %v1462, 0.01
        %v1797 = vmul.f32 %v1464, 0.01
        %v1798 = vmul.f32 %v1539, 0.01
        %v1799 = vmul.f32 %v1541, 0.01
        %v1800 = vmul.f32 %v1616, 0.01
        %v1801 = vmul.f32 %v1618, 0.01
        %v1802 = vmul.f32 %v1693, 0.01
        %v1803 = vmul.f32 %v1695, 0.01
        %v1804 = vmul.f32 %v1770, 0.01
        %v1805 = vmul.f32 %v1772, 0.01
        %v1806 = vmax.f32 %v1225, %v1774
        %v1807 = vmax.f32 %v1227, %v1775
        %v1808 = vmax.f32 %v1302, %v1776
        %v1809 = vmax.f32 %v1304, %v1777
        %v1810 = vmax.f32 %v1379, %v1778
        %v1811 = vmax.f32 %v1381, %v1779
        %v1812 = vmax.f32 %v1456, %v1780
        %v1813 = vmax.f32 %v1458, %v1781
        %v1814 = vmax.f32 %v1533, %v1782
        %v1815 = vmax.f32 %v1535, %v1783
        %v1816 = vmax.f32 %v1610, %v1784
        %v1817 = vmax.f32 %v1612, %v1785
        %v1818 = vmax.f32 %v1687, %v1786
        %v1819 = vmax.f32 %v1689, %v1787
        %v1820 = vmax.f32 %v1764, %v1788
        %v1821 = vmax.f32 %v1766, %v1789
        %v1822 = vmax.f32 %v1231, %v1790
        %v1823 = vmax.f32 %v1233, %v1791
        %v1824 = vmax.f32 %v1308, %v1792
        %v1825 = vmax.f32 %v1310, %v1793
        %v1826 = vmax.f32 %v1385, %v1794
        %v1827 = vmax.f32 %v1387, %v1795
        %v1828 = vmax.f32 %v1462, %v1796
        %v1829 = vmax.f32 %v1464, %v1797
        %v1830 = vmax.f32 %v1539, %v1798
        %v1831 = vmax.f32 %v1541, %v1799
        %v1832 = vmax.f32 %v1616, %v1800
        %v1833 = vmax.f32 %v1618, %v1801
        %v1834 = vmax.f32 %v1693, %v1802
        %v1835 = vmax.f32 %v1695, %v1803
        %v1836 = vmax.f32 %v1770, %v1804
        %v1837 = vmax.f32 %v1772, %v1805
        %1838 = vst [vmem:[%s258] sm:$0xff] %v1806
        %1839 = vst [vmem:[%s258 + $0x8] sm:$0xff] %v1807
        %1840 = vst [vmem:[%s258 + $0x10] sm:$0xff] %v1808
        %1841 = vst [vmem:[%s258 + $0x18] sm:$0xff] %v1809
        %1842 = vst [vmem:[%s258 + $0x20] sm:$0xff] %v1810
        %1843 = vst [vmem:[%s258 + $0x28] sm:$0xff] %v1811
        %1844 = vst [vmem:[%s258 + $0x30] sm:$0xff] %v1812
        %1845 = vst [vmem:[%s258 + $0x38] sm:$0xff] %v1813
        %1846 = vst [vmem:[%s258 + $0x40] sm:$0xff] %v1814
        %1847 = vst [vmem:[%s258 + $0x48] sm:$0xff] %v1815
        %1848 = vst [vmem:[%s258 + $0x50] sm:$0xff] %v1816
        %1849 = vst [vmem:[%s258 + $0x58] sm:$0xff] %v1817
        %1850 = vst [vmem:[%s258 + $0x60] sm:$0xff] %v1818
        %1851 = vst [vmem:[%s258 + $0x68] sm:$0xff] %v1819
        %1852 = vst [vmem:[%s258 + $0x70] sm:$0xff] %v1820
        %1853 = vst [vmem:[%s258 + $0x78] sm:$0xff] %v1821
        %1854 = vst [vmem:[%s258 + $0x80] sm:$0xff] %v1822
        %1855 = vst [vmem:[%s258 + $0x88] sm:$0xff] %v1823
        %1856 = vst [vmem:[%s258 + $0x90] sm:$0xff] %v1824
        %1857 = vst [vmem:[%s258 + $0x98] sm:$0xff] %v1825
        %1858 = vst [vmem:[%s258 + $0xa0] sm:$0xff] %v1826
        %1859 = vst [vmem:[%s258 + $0xa8] sm:$0xff] %v1827
        %1860 = vst [vmem:[%s258 + $0xb0] sm:$0xff] %v1828
        %1861 = vst [vmem:[%s258 + $0xb8] sm:$0xff] %v1829
        %1862 = vst [vmem:[%s258 + $0xc0] sm:$0xff] %v1830
        %1863 = vst [vmem:[%s258 + $0xc8] sm:$0xff] %v1831
        %1864 = vst [vmem:[%s258 + $0xd0] sm:$0xff] %v1832
        %1865 = vst [vmem:[%s258 + $0xd8] sm:$0xff] %v1833
        %1866 = vst [vmem:[%s258 + $0xe0] sm:$0xff] %v1834
        %1867 = vst [vmem:[%s258 + $0xe8] sm:$0xff] %v1835
        %1868 = vst [vmem:[%s258 + $0xf0] sm:$0xff] %v1836
        %1869 = vst [vmem:[%s258 + $0xf8] sm:$0xff] %v1837
        %s1870 = sand.u32 %s156, 1
        %s1871 = scalar_lea.sflag [#allocation4], %s1870
        %s1872 = sand.u32 %s156, 1
        %s1873 = smul.addr %s1872, 256
        %s1874 = scalar_lea.vmem [#allocation5], %s1873
        // Predicated region
        $region45: #{tpu_custom_call.1} parent=39 // pred_check
          %p1875 = pneg %p166
        $region46: #{tpu_custom_call.1} parent=39 // pred_check_branch
          %1877 = sbr.rel (%p1875) target = $region48
        $region47: #{tpu_custom_call.1} parent=39 // pred_region
          %s1878 = smul.u32 16, %s27
          %s1880 = ssub.s32 4096, 4096
          %1881 = vsyncadd %s1871, %s1880
          %s1882 = smul.addr %s26, 64
          %s1883 = sadd.s32 %s1878, %s1882
          %s1884 = smul.addr %s1883, 128
          %s1885 = scalar_lea.hbm %s5, %s1884
          %s1886 = sshll.u32 %s1874, 4
          %s1887 = int_to_ptr.vmem [resolvable:$true] %s1886
          %1892 = dma.vmem_to_hbm [thread:$0]  %s1887, 4096, %s1885, %s1871, 2048, 4096, 128
        $region48: #{tpu_custom_call.1} parent=39 // pred_fallthru
          _
      $region40: #{tpu_custom_call.1} parent=5 // pred_fallthru
        _
      %p1893 = scmp.le.s32.totalorder 2, %s17
      // Predicated region
      $region49: #{tpu_custom_call.1} parent=5 // pred_check
        %p1894 = pneg %p1893
      $region50: #{tpu_custom_call.1} parent=5 // pred_check_branch
        %1896 = sbr.rel (%p1894) target = $region52
      $region51: #{tpu_custom_call.1} parent=5 // pred_region
        %s1897 = ssub.s32 %s17, 2
        // Predicated region
        $region53: #{tpu_custom_call.1} parent=51 // pred_check
          %p1898 = pneg %p172
        $region54: #{tpu_custom_call.1} parent=51 // pred_check_branch
          %1900 = sbr.rel (%p1898) target = $region56
        $region55: #{tpu_custom_call.1} parent=51 // pred_region
          %s1901 = sand.u32 %s157, 1
          %s1902 = scalar_lea.sflag [#allocation4], %s1901
          %s1903 = sand.u32 %s157, 1
          %s1904 = smul.addr %s1903, 256
          %s1905 = scalar_lea.vmem [#allocation5], %s1904
          %1906 = dma.done %s1902, 4096
        $region56: #{tpu_custom_call.1} parent=51 // pred_fallthru
          _
      $region52: #{tpu_custom_call.1} parent=5 // pred_fallthru
        _
    $region6: #{tpu_custom_call.1} parent=1 // loop_footer
      %s21 = sadd.s32 1, %s17
    $region7: #{tpu_custom_call.1} parent=1 // loop_footer_branch
      %16 = sbr.rel target = $region3
    $region8: #{tpu_custom_call.1} parent=1 // loop_exit
      _
    %1907 = vsyncpa [#allocation3], 1
    %s1908 = scalar_lea.sflag [#allocation3], 1
    %1909 = vsyncpa %s1908, 1
    %1910 = vsyncpa [#allocation4], 1
    %s1911 = scalar_lea.sflag [#allocation4], 1
    %1912 = vsyncpa %s1911, 1

</llo_original>
